<compile_context>
chip_gen: v6e
topology: v6e:2x2x1
jax: 0.10.0
libtpu: 0.0.40
codegen_flags: <defaults>
</compile_context>

<pallas_src>
import functools

import jax
import jax.numpy as jnp
import numpy as np
from jax import lax
from jax.experimental import pallas as pl
from jax.experimental.pallas import tpu as pltpu


def _lo2_kernel(H, W, Cb, mm_dtype, x_ref, wwt_ref, bw_ref, wh_ref, bh_ref,
                dw_ref, db_ref, o_ref):
    """One (batch, channel-block) tile.

    x_ref  : (1, Cb*H, W)   input rows for Cb channels (VMEM)
    wwt_ref: (S, S)         W-axis MLP weight, pre-transposed (VMEM)
    bw_ref : (1, S)         W-axis MLP bias (VMEM)
    wh_ref : (S, S)         H-axis MLP weight (VMEM)
    bh_ref : (1, S, 1)      H-axis MLP bias (VMEM)
    dw_ref : (Cb, 9)        depthwise 3x3 taps, tap-minor (VMEM)
    db_ref : (Cb, 1)        depthwise conv bias (VMEM)
    o_ref  : (1, Cb*H, W)   output block (VMEM)
    """
    f32 = jnp.float32
    x2 = x_ref[0]                               # (Cb*H, W)
    x3 = x2.reshape(Cb, H, W)                   # free split above the lane dim

    # ---- DOR_MLP -------------------------------------------------------------
    # W-axis MLP: one big (Cb*H, W) x (W, W) matmul, channels fused into M.
    out_w = jnp.dot(x2.astype(mm_dtype), wwt_ref[...].astype(mm_dtype),
                    preferred_element_type=f32) + bw_ref[...]
    # H-axis MLP: per-channel (S, S) x (S, W) matmuls (no (Cb,H,H) broadcast).
    whv = wh_ref[...].astype(mm_dtype)
    out_h = jnp.stack(
        [jnp.dot(whv, x3[c].astype(mm_dtype), preferred_element_type=f32)
         for c in range(Cb)],
        axis=0) + bh_ref[...]                   # (Cb, S, W)
    dor = jax.nn.gelu(out_w.reshape(Cb, H, W) + out_h)

    # ---- depthwise 3x3 conv, padding = 1 ---------------------------------------
    # Both halos via pltpu.roll (XLU) + iota masks.  Roll is linear, so the
    # three row taps of each column class are summed first and one lane roll +
    # mask is applied per side: 2 sublane rolls + 2 lane rolls in total.
    dwv = dw_ref[...]                            # (Cb, 9), tap k = 3*a + b
    w = [dwv[:, k:k + 1].reshape(Cb, 1, 1) for k in range(9)]

    row = lax.broadcasted_iota(jnp.int32, (Cb, H, W), 1)
    lane = lax.broadcasted_iota(jnp.int32, (Cb, H, W), 2)

    x_up = jnp.where(row >= 1, pltpu.roll(x3, shift=1, axis=1), 0.0)        # i-1
    x_dn = jnp.where(row < H - 1, pltpu.roll(x3, shift=H - 1, axis=1), 0.0)  # i+1

    s_left = w[0] * x_up + w[3] * x3 + w[6] * x_dn    # column j-1 taps
    s_mid = w[1] * x_up + w[4] * x3 + w[7] * x_dn     # column j   taps
    s_right = w[2] * x_up + w[5] * x3 + w[8] * x_dn   # column j+1 taps

    acc = (s_mid
           + jnp.where(lane >= 1, pltpu.roll(s_left, shift=1, axis=2), 0.0)
           + jnp.where(lane < W - 1,
                       pltpu.roll(s_right, shift=W - 1, axis=2), 0.0))
    conv = acc + db_ref[...].reshape(Cb, 1, 1)

    res = (dor + conv).astype(o_ref.dtype)       # (Cb, H, W)

    # Single full-tile store (no per-row masked stores).  Merging (Cb, H) above
    # the lane dim is layout-preserving because H % 8 == 0.
    o_ref[0] = res.reshape(Cb * H, W)


def _vmem_params():
    """(per-step VMEM budget for channel blocking, scoped VMEM limit), bytes."""
    try:
        phys = int(pltpu.get_tpu_info().vmem_capacity_bytes)
    except Exception:  # info unavailable -> assume the smallest (v7x-class) VMEM
        phys = 64 << 20
    if phys >= (128 << 20):          # v5e / v6e: 128 MiB physical VMEM
        return 20 << 20, 48 << 20
    return 10 << 20, 32 << 20        # v7x-class: 64 MiB per TensorCore


def _pick_cb(N, C, H, W, budget):
    """Channel-block size.

    Largest block that fits the per-step VMEM budget (lane padding and the
    tap/weight blocks accounted for), preferring >= 4 total grid steps so each
    megacore TensorCore gets >= 2 pipelined steps (DMA/compute overlap).
    The TPU block rule requires Cb == C or Cb % 8 == 0.
    """
    wp = pl.cdiv(W, 128) * 128       # lane-padded width of (.., W) VMEM tiles
    cands = [d for d in range(1, C + 1)
             if C % d == 0 and (d == C or d % 8 == 0)]
    small = [d for d in cands if d <= 64]      # bound the per-channel unroll
    if small:
        cands = small

    def per_step(d):
        tiles = 16 * d * H * wp * 4            # live f32 temps + 2x-buffered I/O
        weights = 2 * 2 * H * H * 4            # ww^T and wh, double-buffered
        taps = 2 * 2 * max(d, 8) * 128 * 4     # (Cb,9)+(Cb,1), lane-padded, 2x
        return tiles + weights + taps

    fitting = [d for d in cands if per_step(d) <= budget] or [min(cands)]
    good = [d for d in fitting if N * (C // d) >= 4]
    return max(good or fitting)


def lo2_block_forward(x, ww, bw, wh, bh, dw, db, *, matmul_dtype=jnp.float32):
    """x: (N, C, H, W) float32, H == W == img_size (multiple of 8).

    matmul_dtype: jnp.float32 (default; matches the f32 reference within 1e-4)
    or jnp.bfloat16 (faster MXU path on v6e/v7x, relaxed accuracy).
    """
    N, C, H, W = x.shape
    assert H == W, "img_size is square"
    assert H % 8 == 0, "img_size must be a multiple of the sublane tile (8)"
    S = H
    budget, vmem_limit = _vmem_params()
    Cb = _pick_cb(N, C, H, W, budget)

    x_rows = x.reshape(N, C * H, W)            # free (contiguous) reshape
    wwt = ww.T                                 # pre-transposed constant weight
    bw2 = bw.reshape(1, S)
    bh3 = bh.reshape(1, S, 1)
    dw2 = dw.reshape(C, 9)                     # dw2[c, 3*a + b] = dw[c, 0, a, b]
    db2 = db.reshape(C, 1)

    kernel = functools.partial(_lo2_kernel, H, W, Cb, matmul_dtype)

    grid_spec = pltpu.PrefetchScalarGridSpec(
        num_scalar_prefetch=0,
        grid=(N, C // Cb),
        in_specs=[
            pl.BlockSpec((1, Cb * H, W), lambda n, cb: (n, cb, 0)),
            pl.BlockSpec((S, S), lambda n, cb: (0, 0)),
            pl.BlockSpec((1, S), lambda n, cb: (0, 0)),
            pl.BlockSpec((S, S), lambda n, cb: (0, 0)),
            pl.BlockSpec((1, S, 1), lambda n, cb: (0, 0, 0)),
            pl.BlockSpec((Cb, 9), lambda n, cb: (cb, 0)),
            pl.BlockSpec((Cb, 1), lambda n, cb: (cb, 0)),
        ],
        out_specs=pl.BlockSpec((1, Cb * H, W), lambda n, cb: (n, cb, 0)),
    )

    out = pl.pallas_call(
        kernel,
        out_shape=jax.ShapeDtypeStruct((N, C * H, W), x.dtype),
        grid_spec=grid_spec,
        compiler_params=pltpu.CompilerParams(
            dimension_semantics=("parallel", "parallel"),
            vmem_limit_bytes=vmem_limit),
    )(x_rows, wwt, bw2, wh, bh3, dw2, db2)
    return out.reshape(N, C, H, W)


def lo2_block_ref(x, ww, bw, wh, bh, dw, db):
    """Pure-JAX reference for correctness checking."""
    N, C, H, W = x.shape
    hi = lax.Precision.HIGHEST
    out_w = jnp.einsum('nchw,vw->nchv', x, ww,
                       precision=hi) + bw[None, None, None, :]
    out_h = jnp.einsum('gh,nchw->ncgw', wh, x,
                       precision=hi) + bh[None, None, :, None]
    dor = jax.nn.gelu(out_w + out_h)
    conv = lax.conv_general_dilated(
        x, dw, window_strides=(1, 1), padding=((1, 1), (1, 1)),
        dimension_numbers=('NCHW', 'OIHW', 'NCHW'),
        feature_group_count=C, precision=hi) + db[None, :, None, None]
    return dor + conv


if __name__ == "__main__":
    key = jax.random.PRNGKey(0)
    N, C, S = 2, 4, 16          # batch, in_channels, img_size

    ks = jax.random.split(key, 7)
    x = jax.random.normal(ks[0], (N, C, S, S), jnp.float32)
    ww = jax.random.normal(ks[1], (S, S), jnp.float32) / jnp.sqrt(S)
    bw = 0.1 * jax.random.normal(ks[2], (S,), jnp.float32)
    wh = jax.random.normal(ks[3], (S, S), jnp.float32) / jnp.sqrt(S)
    bh = 0.1 * jax.random.normal(ks[4], (S,), jnp.float32)
    dw = jax.random.normal(ks[5], (C, 1, 3, 3), jnp.float32) / 3.0
    db = 0.1 * jax.random.normal(ks[6], (C,), jnp.float32)

    out = lo2_block_forward(x, ww, bw, wh, bh, dw, db)
    out = jax.block_until_ready(out)

    ref = lo2_block_ref(x, ww, bw, wh, bh, dw, db)
    np.testing.assert_allclose(np.asarray(out), np.asarray(ref),
                               rtol=1e-4, atol=1e-4)
    print("KERNEL_OK")
</pallas_src>

<mosaic_0001>
module attributes {stable_mosaic.version = 11 : i64} {
  func.func @_lo2_kernel(%arg0: i32, %arg1: i32, %arg2: memref<1x64x16xf32, #tpu.memory_space<vmem>>, %arg3: memref<16x16xf32, #tpu.memory_space<vmem>>, %arg4: memref<1x16xf32, #tpu.memory_space<vmem>>, %arg5: memref<16x16xf32, #tpu.memory_space<vmem>>, %arg6: memref<1x16x1xf32, #tpu.memory_space<vmem>>, %arg7: memref<4x9xf32, #tpu.memory_space<vmem>>, %arg8: memref<4x1xf32, #tpu.memory_space<vmem>>, %arg9: memref<1x64x16xf32, #tpu.memory_space<vmem>>) attributes {dimension_semantics = [#tpu.dimension_semantics<parallel>, #tpu.dimension_semantics<parallel>], iteration_bounds = array<i64: 2, 1>, scalar_prefetch = 0 : i64, scratch_operands = 0 : i64, tpu.core_type = #tpu.core_type<tc>, window_params = [{transform_indices = @transform_0, window_bounds = array<i64: 1, 64, 16>}, {pipeline_mode = #tpu.pipeline_mode<synchronous>, transform_indices = @transform_1, window_bounds = array<i64: 16, 16>}, {pipeline_mode = #tpu.pipeline_mode<synchronous>, transform_indices = @transform_2, window_bounds = array<i64: 1, 16>}, {pipeline_mode = #tpu.pipeline_mode<synchronous>, transform_indices = @transform_3, window_bounds = array<i64: 16, 16>}, {pipeline_mode = #tpu.pipeline_mode<synchronous>, transform_indices = @transform_4, window_bounds = array<i64: 1, 16, 1>}, {transform_indices = @transform_5, window_bounds = array<i64: 4, 9>}, {transform_indices = @transform_6, window_bounds = array<i64: 4, 1>}, {transform_indices = @transform_7, window_bounds = array<i64: 1, 64, 16>}]} {
    %c0 = arith.constant 0 : index
    %c0_0 = arith.constant 0 : index
    %c0_1 = arith.constant 0 : index
    %0 = vector.load %arg2[%c0, %c0_0, %c0_1] : memref<1x64x16xf32, #tpu.memory_space<vmem>>, vector<1x64x16xf32>
    %1 = vector.shape_cast %0 : vector<1x64x16xf32> to vector<64x16xf32>
    %2 = vector.shape_cast %1 : vector<64x16xf32> to vector<4x16x16xf32>
    %c0_2 = arith.constant 0 : index
    %c0_3 = arith.constant 0 : index
    %3 = vector.load %arg3[%c0_2, %c0_3] : memref<16x16xf32, #tpu.memory_space<vmem>>, vector<16x16xf32>
    %cst = arith.constant dense<0.000000e+00> : vector<64x16xf32>
    %4 = tpu.matmul %1, %3, %cst {dimension_numbers = #tpu.dot_dimension_numbers<[1], [0], [0], [1], [0, 0, 1, 1], [], []>} : vector<64x16xf32>, vector<16x16xf32>, vector<64x16xf32> -> vector<64x16xf32>
    %c0_4 = arith.constant 0 : index
    %c0_5 = arith.constant 0 : index
    %5 = vector.load %arg4[%c0_4, %c0_5] : memref<1x16xf32, #tpu.memory_space<vmem>>, vector<1x16xf32>
    %6 = vector.broadcast %5 : vector<1x16xf32> to vector<64x16xf32>
    %7 = arith.addf %4, %6 : vector<64x16xf32>
    %c0_6 = arith.constant 0 : index
    %c0_7 = arith.constant 0 : index
    %8 = vector.load %arg5[%c0_6, %c0_7] : memref<16x16xf32, #tpu.memory_space<vmem>>, vector<16x16xf32>
    %9 = vector.extract_strided_slice %2 {offsets = [0, 0, 0], sizes = [1, 16, 16], strides = [1, 1, 1]} : vector<4x16x16xf32> to vector<1x16x16xf32>
    %10 = vector.shape_cast %9 : vector<1x16x16xf32> to vector<16x16xf32>
    %cst_8 = arith.constant dense<0.000000e+00> : vector<16x16xf32>
    %11 = tpu.matmul %8, %10, %cst_8 {dimension_numbers = #tpu.dot_dimension_numbers<[1], [0], [0], [1], [0, 0, 1, 1], [], []>} : vector<16x16xf32>, vector<16x16xf32>, vector<16x16xf32> -> vector<16x16xf32>
    %12 = vector.extract_strided_slice %2 {offsets = [1, 0, 0], sizes = [1, 16, 16], strides = [1, 1, 1]} : vector<4x16x16xf32> to vector<1x16x16xf32>
    %13 = vector.shape_cast %12 : vector<1x16x16xf32> to vector<16x16xf32>
    %cst_9 = arith.constant dense<0.000000e+00> : vector<16x16xf32>
    %14 = tpu.matmul %8, %13, %cst_9 {dimension_numbers = #tpu.dot_dimension_numbers<[1], [0], [0], [1], [0, 0, 1, 1], [], []>} : vector<16x16xf32>, vector<16x16xf32>, vector<16x16xf32> -> vector<16x16xf32>
    %15 = vector.extract_strided_slice %2 {offsets = [2, 0, 0], sizes = [1, 16, 16], strides = [1, 1, 1]} : vector<4x16x16xf32> to vector<1x16x16xf32>
    %16 = vector.shape_cast %15 : vector<1x16x16xf32> to vector<16x16xf32>
    %cst_10 = arith.constant dense<0.000000e+00> : vector<16x16xf32>
    %17 = tpu.matmul %8, %16, %cst_10 {dimension_numbers = #tpu.dot_dimension_numbers<[1], [0], [0], [1], [0, 0, 1, 1], [], []>} : vector<16x16xf32>, vector<16x16xf32>, vector<16x16xf32> -> vector<16x16xf32>
    %18 = vector.extract_strided_slice %2 {offsets = [3, 0, 0], sizes = [1, 16, 16], strides = [1, 1, 1]} : vector<4x16x16xf32> to vector<1x16x16xf32>
    %19 = vector.shape_cast %18 : vector<1x16x16xf32> to vector<16x16xf32>
    %cst_11 = arith.constant dense<0.000000e+00> : vector<16x16xf32>
    %20 = tpu.matmul %8, %19, %cst_11 {dimension_numbers = #tpu.dot_dimension_numbers<[1], [0], [0], [1], [0, 0, 1, 1], [], []>} : vector<16x16xf32>, vector<16x16xf32>, vector<16x16xf32> -> vector<16x16xf32>
    %21 = vector.shape_cast %11 : vector<16x16xf32> to vector<1x16x16xf32>
    %22 = vector.shape_cast %14 : vector<16x16xf32> to vector<1x16x16xf32>
    %23 = vector.shape_cast %17 : vector<16x16xf32> to vector<1x16x16xf32>
    %24 = vector.shape_cast %20 : vector<16x16xf32> to vector<1x16x16xf32>
    %25 = tpu.concatenate %21, %22, %23, %24 in 0 : vector<1x16x16xf32>, vector<1x16x16xf32>, vector<1x16x16xf32>, vector<1x16x16xf32> -> vector<4x16x16xf32>
    %c0_12 = arith.constant 0 : index
    %c0_13 = arith.constant 0 : index
    %c0_14 = arith.constant 0 : index
    %26 = vector.load %arg6[%c0_12, %c0_13, %c0_14] : memref<1x16x1xf32, #tpu.memory_space<vmem>>, vector<1x16x1xf32>
    %27 = vector.broadcast %26 : vector<1x16x1xf32> to vector<4x16x16xf32>
    %28 = arith.addf %25, %27 : vector<4x16x16xf32>
    %29 = vector.shape_cast %7 : vector<64x16xf32> to vector<4x16x16xf32>
    %30 = arith.addf %29, %28 : vector<4x16x16xf32>
    %31 = arith.mulf %30, %30 : vector<4x16x16xf32>
    %32 = arith.mulf %30, %31 : vector<4x16x16xf32>
    %cst_15 = arith.constant 4.471500e-02 : f32
    %33 = vector.broadcast %cst_15 : f32 to vector<4x16x16xf32>
    %34 = arith.mulf %33, %32 : vector<4x16x16xf32>
    %35 = arith.addf %30, %34 : vector<4x16x16xf32>
    %cst_16 = arith.constant 0.797884583 : f32
    %36 = vector.broadcast %cst_16 : f32 to vector<4x16x16xf32>
    %37 = arith.mulf %36, %35 : vector<4x16x16xf32>
    %38 = math.tanh %37 : vector<4x16x16xf32>
    %cst_17 = arith.constant 1.000000e+00 : f32
    %39 = vector.broadcast %cst_17 : f32 to vector<4x16x16xf32>
    %40 = arith.addf %39, %38 : vector<4x16x16xf32>
    %cst_18 = arith.constant 5.000000e-01 : f32
    %41 = vector.broadcast %cst_18 : f32 to vector<4x16x16xf32>
    %42 = arith.mulf %41, %40 : vector<4x16x16xf32>
    %43 = arith.mulf %30, %42 : vector<4x16x16xf32>
    %c0_19 = arith.constant 0 : index
    %c0_20 = arith.constant 0 : index
    %44 = vector.load %arg7[%c0_19, %c0_20] : memref<4x9xf32, #tpu.memory_space<vmem>>, vector<4x9xf32>
    %45 = vector.extract_strided_slice %44 {offsets = [0, 0], sizes = [4, 1], strides = [1, 1]} : vector<4x9xf32> to vector<4x1xf32>
    %46 = vector.shape_cast %45 : vector<4x1xf32> to vector<4x1x1xf32>
    %47 = vector.extract_strided_slice %44 {offsets = [0, 1], sizes = [4, 1], strides = [1, 1]} : vector<4x9xf32> to vector<4x1xf32>
    %48 = vector.shape_cast %47 : vector<4x1xf32> to vector<4x1x1xf32>
    %49 = vector.extract_strided_slice %44 {offsets = [0, 2], sizes = [4, 1], strides = [1, 1]} : vector<4x9xf32> to vector<4x1xf32>
    %50 = vector.shape_cast %49 : vector<4x1xf32> to vector<4x1x1xf32>
    %51 = vector.extract_strided_slice %44 {offsets = [0, 3], sizes = [4, 1], strides = [1, 1]} : vector<4x9xf32> to vector<4x1xf32>
    %52 = vector.shape_cast %51 : vector<4x1xf32> to vector<4x1x1xf32>
    %53 = vector.extract_strided_slice %44 {offsets = [0, 4], sizes = [4, 1], strides = [1, 1]} : vector<4x9xf32> to vector<4x1xf32>
    %54 = vector.shape_cast %53 : vector<4x1xf32> to vector<4x1x1xf32>
    %55 = vector.extract_strided_slice %44 {offsets = [0, 5], sizes = [4, 1], strides = [1, 1]} : vector<4x9xf32> to vector<4x1xf32>
    %56 = vector.shape_cast %55 : vector<4x1xf32> to vector<4x1x1xf32>
    %57 = vector.extract_strided_slice %44 {offsets = [0, 6], sizes = [4, 1], strides = [1, 1]} : vector<4x9xf32> to vector<4x1xf32>
    %58 = vector.shape_cast %57 : vector<4x1xf32> to vector<4x1x1xf32>
    %59 = vector.extract_strided_slice %44 {offsets = [0, 7], sizes = [4, 1], strides = [1, 1]} : vector<4x9xf32> to vector<4x1xf32>
    %60 = vector.shape_cast %59 : vector<4x1xf32> to vector<4x1x1xf32>
    %61 = vector.extract_strided_slice %44 {offsets = [0, 8], sizes = [4, 1], strides = [1, 1]} : vector<4x9xf32> to vector<4x1xf32>
    %62 = vector.shape_cast %61 : vector<4x1xf32> to vector<4x1x1xf32>
    %63 = tpu.iota {dimensions = array<i32: 1>} : vector<4x16x16xi32>
    %64 = tpu.iota {dimensions = array<i32: 2>} : vector<4x16x16xi32>
    %c1_i32 = arith.constant 1 : i32
    %65 = vector.broadcast %c1_i32 : i32 to vector<4x16x16xi32>
    %66 = arith.cmpi sge, %63, %65 : vector<4x16x16xi32>
    %c1_i32_21 = arith.constant 1 : i32
    %67 = tpu.dynamic_rotate %2 by %c1_i32_21 dim 1 : vector<4x16x16xf32>, i32 -> vector<4x16x16xf32>
    %cst_22 = arith.constant 0.000000e+00 : f32
    %68 = vector.broadcast %cst_22 : f32 to vector<4x16x16xf32>
    %69 = arith.select %66, %67, %68 : vector<4x16x16xi1>, vector<4x16x16xf32>
    %c15_i32 = arith.constant 15 : i32
    %70 = vector.broadcast %c15_i32 : i32 to vector<4x16x16xi32>
    %71 = arith.cmpi slt, %63, %70 : vector<4x16x16xi32>
    %c15_i32_23 = arith.constant 15 : i32
    %72 = tpu.dynamic_rotate %2 by %c15_i32_23 dim 1 : vector<4x16x16xf32>, i32 -> vector<4x16x16xf32>
    %cst_24 = arith.constant 0.000000e+00 : f32
    %73 = vector.broadcast %cst_24 : f32 to vector<4x16x16xf32>
    %74 = arith.select %71, %72, %73 : vector<4x16x16xi1>, vector<4x16x16xf32>
    %75 = vector.broadcast %46 : vector<4x1x1xf32> to vector<4x16x16xf32>
    %76 = arith.mulf %75, %69 : vector<4x16x16xf32>
    %77 = vector.broadcast %52 : vector<4x1x1xf32> to vector<4x16x16xf32>
    %78 = arith.mulf %77, %2 : vector<4x16x16xf32>
    %79 = arith.addf %76, %78 : vector<4x16x16xf32>
    %80 = vector.broadcast %58 : vector<4x1x1xf32> to vector<4x16x16xf32>
    %81 = arith.mulf %80, %74 : vector<4x16x16xf32>
    %82 = arith.addf %79, %81 : vector<4x16x16xf32>
    %83 = vector.broadcast %48 : vector<4x1x1xf32> to vector<4x16x16xf32>
    %84 = arith.mulf %83, %69 : vector<4x16x16xf32>
    %85 = vector.broadcast %54 : vector<4x1x1xf32> to vector<4x16x16xf32>
    %86 = arith.mulf %85, %2 : vector<4x16x16xf32>
    %87 = arith.addf %84, %86 : vector<4x16x16xf32>
    %88 = vector.broadcast %60 : vector<4x1x1xf32> to vector<4x16x16xf32>
    %89 = arith.mulf %88, %74 : vector<4x16x16xf32>
    %90 = arith.addf %87, %89 : vector<4x16x16xf32>
    %91 = vector.broadcast %50 : vector<4x1x1xf32> to vector<4x16x16xf32>
    %92 = arith.mulf %91, %69 : vector<4x16x16xf32>
    %93 = vector.broadcast %56 : vector<4x1x1xf32> to vector<4x16x16xf32>
    %94 = arith.mulf %93, %2 : vector<4x16x16xf32>
    %95 = arith.addf %92, %94 : vector<4x16x16xf32>
    %96 = vector.broadcast %62 : vector<4x1x1xf32> to vector<4x16x16xf32>
    %97 = arith.mulf %96, %74 : vector<4x16x16xf32>
    %98 = arith.addf %95, %97 : vector<4x16x16xf32>
    %c1_i32_25 = arith.constant 1 : i32
    %99 = vector.broadcast %c1_i32_25 : i32 to vector<4x16x16xi32>
    %100 = arith.cmpi sge, %64, %99 : vector<4x16x16xi32>
    %c1_i32_26 = arith.constant 1 : i32
    %101 = tpu.dynamic_rotate %82 by %c1_i32_26 dim 2 : vector<4x16x16xf32>, i32 -> vector<4x16x16xf32>
    %cst_27 = arith.constant 0.000000e+00 : f32
    %102 = vector.broadcast %cst_27 : f32 to vector<4x16x16xf32>
    %103 = arith.select %100, %101, %102 : vector<4x16x16xi1>, vector<4x16x16xf32>
    %104 = arith.addf %90, %103 : vector<4x16x16xf32>
    %c15_i32_28 = arith.constant 15 : i32
    %105 = vector.broadcast %c15_i32_28 : i32 to vector<4x16x16xi32>
    %106 = arith.cmpi slt, %64, %105 : vector<4x16x16xi32>
    %c15_i32_29 = arith.constant 15 : i32
    %107 = tpu.dynamic_rotate %98 by %c15_i32_29 dim 2 : vector<4x16x16xf32>, i32 -> vector<4x16x16xf32>
    %cst_30 = arith.constant 0.000000e+00 : f32
    %108 = vector.broadcast %cst_30 : f32 to vector<4x16x16xf32>
    %109 = arith.select %106, %107, %108 : vector<4x16x16xi1>, vector<4x16x16xf32>
    %110 = arith.addf %104, %109 : vector<4x16x16xf32>
    %c0_31 = arith.constant 0 : index
    %c0_32 = arith.constant 0 : index
    %111 = vector.load %arg8[%c0_31, %c0_32] : memref<4x1xf32, #tpu.memory_space<vmem>>, vector<4x1xf32>
    %112 = vector.shape_cast %111 : vector<4x1xf32> to vector<4x1x1xf32>
    %113 = vector.broadcast %112 : vector<4x1x1xf32> to vector<4x16x16xf32>
    %114 = arith.addf %110, %113 : vector<4x16x16xf32>
    %115 = arith.addf %43, %114 : vector<4x16x16xf32>
    %116 = vector.shape_cast %115 : vector<4x16x16xf32> to vector<64x16xf32>
    %c0_33 = arith.constant 0 : index
    %c0_34 = arith.constant 0 : index
    %c0_35 = arith.constant 0 : index
    %117 = vector.load %arg9[%c0_33, %c0_34, %c0_35] : memref<1x64x16xf32, #tpu.memory_space<vmem>>, vector<1x64x16xf32>
    %118 = vector.shape_cast %117 : vector<1x64x16xf32> to vector<64x16xf32>
    %119 = vector.shape_cast %116 : vector<64x16xf32> to vector<1x64x16xf32>
    tpu.vector_store %arg9[%c0_33, %c0_34, %c0_35], %119 {strides = array<i32>} : memref<1x64x16xf32, #tpu.memory_space<vmem>>, vector<1x64x16xf32>,
    return
  }
  func.func @transform_0(%arg0: i32, %arg1: i32) -> (i32, i32, i32) {
    %c0_i32 = arith.constant 0 : i32
    %c0_i32_0 = arith.constant 0 : i32
    return %arg0, %arg1, %c0_i32 : i32, i32, i32
  }
  func.func @transform_1(%arg0: i32, %arg1: i32) -> (i32, i32) {
    %c0_i32 = arith.constant 0 : i32
    %c0_i32_0 = arith.constant 0 : i32
    %c0_i32_1 = arith.constant 0 : i32
    return %c0_i32, %c0_i32_0 : i32, i32
  }
  func.func @transform_2(%arg0: i32, %arg1: i32) -> (i32, i32) {
    %c0_i32 = arith.constant 0 : i32
    %c0_i32_0 = arith.constant 0 : i32
    %c0_i32_1 = arith.constant 0 : i32
    return %c0_i32, %c0_i32_0 : i32, i32
  }
  func.func @transform_3(%arg0: i32, %arg1: i32) -> (i32, i32) {
    %c0_i32 = arith.constant 0 : i32
    %c0_i32_0 = arith.constant 0 : i32
    %c0_i32_1 = arith.constant 0 : i32
    return %c0_i32, %c0_i32_0 : i32, i32
  }
  func.func @transform_4(%arg0: i32, %arg1: i32) -> (i32, i32, i32) {
    %c0_i32 = arith.constant 0 : i32
    %c0_i32_0 = arith.constant 0 : i32
    %c0_i32_1 = arith.constant 0 : i32
    %c0_i32_2 = arith.constant 0 : i32
    return %c0_i32, %c0_i32_0, %c0_i32_1 : i32, i32, i32
  }
  func.func @transform_5(%arg0: i32, %arg1: i32) -> (i32, i32) {
    %c0_i32 = arith.constant 0 : i32
    %c0_i32_0 = arith.constant 0 : i32
    return %arg1, %c0_i32 : i32, i32
  }
  func.func @transform_6(%arg0: i32, %arg1: i32) -> (i32, i32) {
    %c0_i32 = arith.constant 0 : i32
    %c0_i32_0 = arith.constant 0 : i32
    return %arg1, %c0_i32 : i32, i32
  }
  func.func @transform_7(%arg0: i32, %arg1: i32) -> (i32, i32, i32) {
    %c0_i32 = arith.constant 0 : i32
    %c0_i32_0 = arith.constant 0 : i32
    return %arg0, %arg1, %c0_i32 : i32, i32, i32
  }
}

</mosaic_0001>

<llo_original>
// kernel: tpu_custom_call.1
$region0: #{tpu_custom_call.1}
  #allocation0 [shape = 'u32[]', space=smem, size = 0x4, offset = 0x4, fixed_abs, tag = 'smem constant byte address 0x4 - core index']
  #allocation1 [shape = 'u32[144,128]{1,0:T(1,128)}', space=vmem, size = 0x12000, scoped, tag = 'internal scratch']
  %s0 = inlined_call_operand.vmem [shape: f32[2,64,16], index: 0, kind: input, shape index: {}]
  %s1 = inlined_call_operand.vmem [shape: f32[16,16], index: 1, kind: input, shape index: {}]
  %s2 = inlined_call_operand.vmem [shape: f32[1,16], index: 2, kind: input, shape index: {}]
  %s3 = inlined_call_operand.vmem [shape: f32[16,16], index: 3, kind: input, shape index: {}]
  %s4 = inlined_call_operand.vmem [shape: f32[1,16,1], index: 4, kind: input, shape index: {}]
  %s5 = inlined_call_operand.vmem [shape: f32[4,9], index: 5, kind: input, shape index: {}]
  %s6 = inlined_call_operand.vmem [shape: f32[4,1], index: 6, kind: input, shape index: {}]
  %s7 = inlined_call_operand.vmem [shape: f32[2,64,16], index: 7, kind: output, shape index: {}]
  %s8 = sld [smem:[#allocation0]]
  $region61: #{tpu_custom_call.1} parent=0
    _
  %s10 = ssub.s32 1, %s8
  %s11 = scalar_select 0, %s10, %s8
  loop: start=0, step=1, limit=4
  $region2: #{tpu_custom_call.1} parent=0 // loop_pre_header
    _
  $region3: #{tpu_custom_call.1} parent=0 // loop_header
    %s13 = sphi 0, %s17
    %p14 = scmp.ge.s32.totalorder %s13, 4
    %s20 = sphi 0, %s32
    %s21 = sphi 0, %s28
    %s22 = sphi 0, %s20
    %s23 = sphi 0, %s21
    %s24 = sphi 0, %s22
    %s25 = sphi 0, %s23
    %s37 = sphi 0, %s39
    %s40 = sphi 0, %s37
    %s41 = sphi 0, %s40
    %s57 = sphi 0, %s41
    %s61 = sphi 0, %s61
    %s63 = sphi 0, %s61
    %s64 = sphi 0, %s63
    %s78 = sphi 0, %s64
    %s82 = sphi 0, %s82
    %s84 = sphi 0, %s82
    %s85 = sphi 0, %s84
    %s99 = sphi 0, %s85
    %s103 = sphi 0, %s103
    %s105 = sphi 0, %s103
    %s106 = sphi 0, %s105
    %s120 = sphi 0, %s106
    %s124 = sphi 0, %s124
    %s126 = sphi 0, %s124
    %s127 = sphi 0, %s126
    %s141 = sphi 0, %s127
    %s147 = sphi 0, %s149
    %s150 = sphi 0, %s147
    %s151 = sphi 0, %s150
    %s167 = sphi 0, %s151
    %s173 = sphi 0, %s175
    %s176 = sphi 0, %s173
    %s177 = sphi 0, %s176
    %s193 = sphi 0, %s177
    %s201 = sphi 0, %s203
    %s204 = sphi 0, %s201
    %s205 = sphi 0, %s204
    %s221 = sphi 0, %s205
  $region4: #{tpu_custom_call.1} parent=0 // loop_header_branch
    %16 = sbr.rel (%p14) target = $region8
  $region5: #{tpu_custom_call.1} parent=0 // loop_body
    %s18 = ssub.s32 %s13, 1
    %s19 = ssub.s32 %s13, 2
    %s26 = sadd.s32 1, %s21
    %p27 = scmp.ge.s32.totalorder %s26, 1
    %s28 = scalar_select %p27, 0, %s26
    %s29 = sadd.s32 1, %s20
    %s30 = scalar_select %p27, %s29, %s20
    %p31 = scmp.ge.s32.totalorder %s30, 2
    %s32 = scalar_select %p31, 0, %s30
    %s33 = ssub.s32 %s20, %s32
    %s34 = ssub.s32 %s21, %s28
    %s35 = sor.u32 %s33, %s34
    %p36 = scmp.eq.s32.totalorder %s35, 0
    %s38 = sadd.s32 %s37, 1
    %s39 = scalar_select %p36, %s37, %s38
    %p42 = pneg %p36
    %p43 = scmp.eq.s32.totalorder %s13, 1
    %p44 = por %p42, %p43
    %p45 = scmp.ne.s32.totalorder %s37, %s40
    %p46 = scmp.eq.s32.totalorder %s13, 0
    %p47 = por %p45, %p46
    %p48 = scmp.ne.s32.totalorder %s37, %s40
    %p49 = scmp.eq.s32.totalorder %s18, 1
    %p50 = por %p48, %p49
    %p51 = scmp.ne.s32.totalorder %s40, %s41
    %p52 = scmp.eq.s32.totalorder %s18, 0
    %p53 = por %p51, %p52
    %p54 = scmp.ne.s32.totalorder %s40, %s41
    %p55 = scmp.eq.s32.totalorder %s19, 1
    %p56 = por %p54, %p55
    %p58 = scmp.ne.s32.totalorder %s41, %s57
    %p59 = scmp.eq.s32.totalorder %s19, 0
    %p60 = por %p58, %p59
    %s62 = sadd.s32 %s61, 1
    %p65 = scmp.eq.s32.totalorder %s13, 1
    %p66 = scmp.ne.s32.totalorder %s61, %s63
    %p67 = scmp.eq.s32.totalorder %s13, 0
    %p68 = por %p66, %p67
    %p69 = scmp.ne.s32.totalorder %s61, %s63
    %p70 = scmp.eq.s32.totalorder %s18, 1
    %p71 = por %p69, %p70
    %p72 = scmp.ne.s32.totalorder %s63, %s64
    %p73 = scmp.eq.s32.totalorder %s18, 0
    %p74 = por %p72, %p73
    %p75 = scmp.ne.s32.totalorder %s63, %s64
    %p76 = scmp.eq.s32.totalorder %s19, 1
    %p77 = por %p75, %p76
    %p79 = scmp.ne.s32.totalorder %s64, %s78
    %p80 = scmp.eq.s32.totalorder %s19, 0
    %p81 = por %p79, %p80
    %s83 = sadd.s32 %s82, 1
    %p86 = scmp.eq.s32.totalorder %s13, 1
    %p87 = scmp.ne.s32.totalorder %s82, %s84
    %p88 = scmp.eq.s32.totalorder %s13, 0
    %p89 = por %p87, %p88
    %p90 = scmp.ne.s32.totalorder %s82, %s84
    %p91 = scmp.eq.s32.totalorder %s18, 1
    %p92 = por %p90, %p91
    %p93 = scmp.ne.s32.totalorder %s84, %s85
    %p94 = scmp.eq.s32.totalorder %s18, 0
    %p95 = por %p93, %p94
    %p96 = scmp.ne.s32.totalorder %s84, %s85
    %p97 = scmp.eq.s32.totalorder %s19, 1
    %p98 = por %p96, %p97
    %p100 = scmp.ne.s32.totalorder %s85, %s99
    %p101 = scmp.eq.s32.totalorder %s19, 0
    %p102 = por %p100, %p101
    %s104 = sadd.s32 %s103, 1
    %p107 = scmp.eq.s32.totalorder %s13, 1
    %p108 = scmp.ne.s32.totalorder %s103, %s105
    %p109 = scmp.eq.s32.totalorder %s13, 0
    %p110 = por %p108, %p109
    %p111 = scmp.ne.s32.totalorder %s103, %s105
    %p112 = scmp.eq.s32.totalorder %s18, 1
    %p113 = por %p111, %p112
    %p114 = scmp.ne.s32.totalorder %s105, %s106
    %p115 = scmp.eq.s32.totalorder %s18, 0
    %p116 = por %p114, %p115
    %p117 = scmp.ne.s32.totalorder %s105, %s106
    %p118 = scmp.eq.s32.totalorder %s19, 1
    %p119 = por %p117, %p118
    %p121 = scmp.ne.s32.totalorder %s106, %s120
    %p122 = scmp.eq.s32.totalorder %s19, 0
    %p123 = por %p121, %p122
    %s125 = sadd.s32 %s124, 1
    %p128 = scmp.eq.s32.totalorder %s13, 1
    %p129 = scmp.ne.s32.totalorder %s124, %s126
    %p130 = scmp.eq.s32.totalorder %s13, 0
    %p131 = por %p129, %p130
    %p132 = scmp.ne.s32.totalorder %s124, %s126
    %p133 = scmp.eq.s32.totalorder %s18, 1
    %p134 = por %p132, %p133
    %p135 = scmp.ne.s32.totalorder %s126, %s127
    %p136 = scmp.eq.s32.totalorder %s18, 0
    %p137 = por %p135, %p136
    %p138 = scmp.ne.s32.totalorder %s126, %s127
    %p139 = scmp.eq.s32.totalorder %s19, 1
    %p140 = por %p138, %p139
    %p142 = scmp.ne.s32.totalorder %s127, %s141
    %p143 = scmp.eq.s32.totalorder %s19, 0
    %p144 = por %p142, %p143
    %s145 = ssub.s32 %s21, %s28
    %p146 = scmp.eq.s32.totalorder %s145, 0
    %s148 = sadd.s32 %s147, 1
    %s149 = scalar_select %p146, %s147, %s148
    %p152 = pneg %p146
    %p153 = scmp.eq.s32.totalorder %s13, 1
    %p154 = por %p152, %p153
    %p155 = scmp.ne.s32.totalorder %s147, %s150
    %p156 = scmp.eq.s32.totalorder %s13, 0
    %p157 = por %p155, %p156
    %p158 = scmp.ne.s32.totalorder %s147, %s150
    %p159 = scmp.eq.s32.totalorder %s18, 1
    %p160 = por %p158, %p159
    %p161 = scmp.ne.s32.totalorder %s150, %s151
    %p162 = scmp.eq.s32.totalorder %s18, 0
    %p163 = por %p161, %p162
    %p164 = scmp.ne.s32.totalorder %s150, %s151
    %p165 = scmp.eq.s32.totalorder %s19, 1
    %p166 = por %p164, %p165
    %p168 = scmp.ne.s32.totalorder %s151, %s167
    %p169 = scmp.eq.s32.totalorder %s19, 0
    %p170 = por %p168, %p169
    %s171 = ssub.s32 %s21, %s28
    %p172 = scmp.eq.s32.totalorder %s171, 0
    %s174 = sadd.s32 %s173, 1
    %s175 = scalar_select %p172, %s173, %s174
    %p178 = pneg %p172
    %p179 = scmp.eq.s32.totalorder %s13, 1
    %p180 = por %p178, %p179
    %p181 = scmp.ne.s32.totalorder %s173, %s176
    %p182 = scmp.eq.s32.totalorder %s13, 0
    %p183 = por %p181, %p182
    %p184 = scmp.ne.s32.totalorder %s173, %s176
    %p185 = scmp.eq.s32.totalorder %s18, 1
    %p186 = por %p184, %p185
    %p187 = scmp.ne.s32.totalorder %s176, %s177
    %p188 = scmp.eq.s32.totalorder %s18, 0
    %p189 = por %p187, %p188
    %p190 = scmp.ne.s32.totalorder %s176, %s177
    %p191 = scmp.eq.s32.totalorder %s19, 1
    %p192 = por %p190, %p191
    %p194 = scmp.ne.s32.totalorder %s177, %s193
    %p195 = scmp.eq.s32.totalorder %s19, 0
    %p196 = por %p194, %p195
    %s197 = ssub.s32 %s20, %s32
    %s198 = ssub.s32 %s21, %s28
    %s199 = sor.u32 %s197, %s198
    %p200 = scmp.eq.s32.totalorder %s199, 0
    %s202 = sadd.s32 %s201, 1
    %s203 = scalar_select %p200, %s201, %s202
    %p206 = pneg %p200
    %p207 = scmp.eq.s32.totalorder %s13, 1
    %p208 = por %p206, %p207
    %p209 = scmp.ne.s32.totalorder %s201, %s204
    %p210 = scmp.eq.s32.totalorder %s13, 0
    %p211 = por %p209, %p210
    %p212 = scmp.ne.s32.totalorder %s201, %s204
    %p213 = scmp.eq.s32.totalorder %s18, 1
    %p214 = por %p212, %p213
    %p215 = scmp.ne.s32.totalorder %s204, %s205
    %p216 = scmp.eq.s32.totalorder %s18, 0
    %p217 = por %p215, %p216
    %p218 = scmp.ne.s32.totalorder %s204, %s205
    %p219 = scmp.eq.s32.totalorder %s19, 1
    %p220 = por %p218, %p219
    %p222 = scmp.ne.s32.totalorder %s205, %s221
    %p223 = scmp.eq.s32.totalorder %s19, 0
    %p224 = por %p222, %p223
    %p225 = scmp.le.s32.totalorder 1, %s13
    %p226 = scmp.lt.s32.totalorder %s13, 3
    %p227 = pnand %p225, %p226
    %p228 = pneg %p227
    // Predicated region
    $region9: #{tpu_custom_call.1} parent=5 // pred_check
      _
    $region10: #{tpu_custom_call.1} parent=5 // pred_check_branch
      %230 = sbr.rel (%p227) target = $region12
    $region11: #{tpu_custom_call.1} parent=5 // pred_region
      %s231 = ssub.s32 %s13, 1
      // Predicated region
      $region13: #{tpu_custom_call.1} parent=11 // pred_check
        %p232 = pneg %p74
      $region14: #{tpu_custom_call.1} parent=11 // pred_check_branch
        %234 = sbr.rel (%p232) target = $region16
      $region15: #{tpu_custom_call.1} parent=11 // pred_region
        _
      $region16: #{tpu_custom_call.1} parent=11 // pred_fallthru
        _
      // Predicated region
      $region17: #{tpu_custom_call.1} parent=11 // pred_check
        %p235 = pneg %p95
      $region18: #{tpu_custom_call.1} parent=11 // pred_check_branch
        %237 = sbr.rel (%p235) target = $region20
      $region19: #{tpu_custom_call.1} parent=11 // pred_region
        _
      $region20: #{tpu_custom_call.1} parent=11 // pred_fallthru
        _
      // Predicated region
      $region21: #{tpu_custom_call.1} parent=11 // pred_check
        %p238 = pneg %p116
      $region22: #{tpu_custom_call.1} parent=11 // pred_check_branch
        %240 = sbr.rel (%p238) target = $region24
      $region23: #{tpu_custom_call.1} parent=11 // pred_region
        _
      $region24: #{tpu_custom_call.1} parent=11 // pred_fallthru
        _
      // Predicated region
      $region25: #{tpu_custom_call.1} parent=11 // pred_check
        %p241 = pneg %p137
      $region26: #{tpu_custom_call.1} parent=11 // pred_check_branch
        %243 = sbr.rel (%p241) target = $region28
      $region27: #{tpu_custom_call.1} parent=11 // pred_region
        _
      $region28: #{tpu_custom_call.1} parent=11 // pred_fallthru
        _
      // Predicated region
      $region29: #{tpu_custom_call.1} parent=11 // pred_check
        %p244 = pneg %p163
      $region30: #{tpu_custom_call.1} parent=11 // pred_check_branch
        %246 = sbr.rel (%p244) target = $region32
      $region31: #{tpu_custom_call.1} parent=11 // pred_region
        %p247 = scmp.lt.s32.totalorder %s23, 0
        %s248 = scalar_select %p247, %s23, 0
        %s249 = smul.addr %s248, 4
        %s250 = scalar_lea.vmem %s5, %s249
      $region32: #{tpu_custom_call.1} parent=11 // pred_fallthru
        _
      // Predicated region
      $region33: #{tpu_custom_call.1} parent=11 // pred_check
        %p251 = pneg %p189
      $region34: #{tpu_custom_call.1} parent=11 // pred_check_branch
        %253 = sbr.rel (%p251) target = $region36
      $region35: #{tpu_custom_call.1} parent=11 // pred_region
        %p254 = scmp.lt.s32.totalorder %s23, 0
        %s255 = scalar_select %p254, %s23, 0
        %s256 = smul.addr %s255, 4
        %s257 = scalar_lea.vmem %s6, %s256
      $region36: #{tpu_custom_call.1} parent=11 // pred_fallthru
        _
    $region12: #{tpu_custom_call.1} parent=5 // pred_fallthru
      _
    %p258 = scmp.lt.s32.totalorder %s13, 2
    // Predicated region
    $region37: #{tpu_custom_call.1} parent=5 // pred_check
      %p259 = pneg %p258
    $region38: #{tpu_custom_call.1} parent=5 // pred_check_branch
      %261 = sbr.rel (%p259) target = $region40
    $region39: #{tpu_custom_call.1} parent=5 // pred_region
      // Predicated region
      $region41: #{tpu_custom_call.1} parent=39 // pred_check
        %p262 = pneg %p47
      $region42: #{tpu_custom_call.1} parent=39 // pred_check_branch
        %264 = sbr.rel (%p262) target = $region44
      $region43: #{tpu_custom_call.1} parent=39 // pred_region
        %s265 = smul.u32 8, %s21
        %p266 = scmp.lt.s32.totalorder %s20, 1
        %s267 = scalar_select %p266, %s20, 1
        %p268 = scmp.lt.s32.totalorder %s265, 7
        %s269 = scalar_select %p268, %s265, 7
        %s270 = smul.addr %s267, 8
        %s271 = sadd.s32 %s269, %s270
        %s272 = smul.addr %s271, 8
        %s273 = scalar_lea.vmem %s0, %s272
        %s274 = smul.u32 8, %s21
      $region44: #{tpu_custom_call.1} parent=39 // pred_fallthru
        _
    $region40: #{tpu_custom_call.1} parent=5 // pred_fallthru
      _
    %p275 = scmp.le.s32.totalorder 1, %s13
    %p276 = scmp.lt.s32.totalorder %s13, 3
    %p277 = pnand %p275, %p276
    %p278 = pneg %p277
    // Predicated region
    $region45: #{tpu_custom_call.1} parent=5 // pred_check
      _
    $region46: #{tpu_custom_call.1} parent=5 // pred_check_branch
      %280 = sbr.rel (%p277) target = $region48
    $region47: #{tpu_custom_call.1} parent=5 // pred_region
      %s281 = ssub.s32 %s13, 1
      %s282 = smul.u32 8, %s23
      %p283 = scmp.lt.s32.totalorder %s22, 1
      %s284 = scalar_select %p283, %s22, 1
      %p285 = scmp.lt.s32.totalorder %s282, 7
      %s286 = scalar_select %p285, %s282, 7
      %s287 = smul.addr %s284, 8
      %s288 = sadd.s32 %s286, %s287
      %s289 = smul.addr %s288, 8
      %s290 = scalar_lea.vmem %s0, %s289
      %p291 = pneg %p53
      %p292 = pneg %p50
      %p293 = pneg %p74
      %p294 = pneg %p71
      %p295 = pneg %p95
      %p296 = pneg %p92
      %p297 = pneg %p116
      %p298 = pneg %p113
      %p299 = pneg %p137
      %p300 = pneg %p134
      %p301 = scmp.lt.s32.totalorder %s23, 0
      %s302 = scalar_select %p301, %s23, 0
      %s303 = smul.addr %s302, 4
      %s304 = scalar_lea.vmem %s5, %s303
      %p305 = pneg %p163
      %p306 = pneg %p160
      %p307 = scmp.lt.s32.totalorder %s23, 0
      %s308 = scalar_select %p307, %s23, 0
      %s309 = smul.addr %s308, 4
      %s310 = scalar_lea.vmem %s6, %s309
      %p311 = pneg %p189
      %p312 = pneg %p186
      %p313 = pneg %p217
      %p314 = pneg %p214
      %s315 = smul.u32 8, %s23
      %p316 = scmp.lt.s32.totalorder %s22, 1
      %s317 = scalar_select %p316, %s22, 1
      %p318 = scmp.lt.s32.totalorder %s315, 7
      %s319 = scalar_select %p318, %s315, 7
      %s320 = smul.addr %s317, 8
      %s321 = sadd.s32 %s319, %s320
      %s322 = smul.addr %s321, 8
      %s323 = scalar_lea.vmem %s7, %s322
      %s324 = smul.u32 8, %s23
      %p325 = scmp.lt.s32.totalorder %s22, 1
      %s326 = scalar_select %p325, %s22, 1
      %p327 = scmp.lt.s32.totalorder %s324, 7
      %s328 = scalar_select %p327, %s324, 7
      %s329 = smul.addr %s326, 8
      %s330 = sadd.s32 %s328, %s329
      %s331 = smul.addr %s330, 8
      %s332 = scalar_lea.vmem %s0, %s331
      %s333 = smul.u32 8, %s23
      %p334 = scmp.lt.s32.totalorder %s23, 0
      %s335 = scalar_select %p334, %s23, 0
      %s336 = smul.addr %s335, 4
      %s337 = scalar_lea.vmem %s5, %s336
      %p338 = scmp.lt.s32.totalorder %s23, 0
      %s339 = scalar_select %p338, %s23, 0
      %s340 = smul.addr %s339, 4
      %s341 = scalar_lea.vmem %s6, %s340
      %s342 = smul.u32 8, %s23
      %p343 = scmp.lt.s32.totalorder %s22, 1
      %s344 = scalar_select %p343, %s22, 1
      %p345 = scmp.lt.s32.totalorder %s342, 7
      %s346 = scalar_select %p345, %s342, 7
      %s347 = smul.addr %s344, 8
      %s348 = sadd.s32 %s346, %s347
      %s349 = smul.addr %s348, 8
      %s350 = scalar_lea.vmem %s7, %s349
      %s351 = smul.u32 8, %s23
      %v352 = vld [vmem:[%s332] sm:$0xff]
      %v353 = vld [vmem:[%s332 + $0x8] sm:$0xff]
      %v354 = vld [vmem:[%s332 + $0x10] sm:$0xff]
      %v355 = vld [vmem:[%s332 + $0x18] sm:$0xff]
      %v356 = vld [vmem:[%s332 + $0x20] sm:$0xff]
      %v357 = vld [vmem:[%s332 + $0x28] sm:$0xff]
      %v358 = vld [vmem:[%s332 + $0x30] sm:$0xff]
      %v359 = vld [vmem:[%s332 + $0x38] sm:$0xff]
      %v360 = vld [vmem:[%s1] sm:$0xff]
      %v361 = vld [vmem:[%s1 + $0x8] sm:$0xff]
      %v362 = vld [vmem:[%s2] sm:$0x1]
      %v364 = vlaneseq
      %v365 = vshrl.u32 %v364, 7
      %v366 = vsub.s32 0, %v365
      %v367 = vrot.slane %v362, %v366
      %vm369 = vcmask 130048
      %v371 = vsel %vm369, %v352, 0
      %v374 = vsel %vm369, %v353, 0
      %v377 = vsel %vm369, %v354, 0
      %v380 = vsel %vm369, %v355, 0
      %v383 = vsel %vm369, %v356, 0
      %v386 = vsel %vm369, %v357, 0
      %v389 = vsel %vm369, %v358, 0
      %v392 = vsel %vm369, %v359, 0
      %394 = vmatprep.subr.mxu0 0.0
      %395 = vmatpush1.msra.mxu0 0.0
      %396 = vmatprep.subr.mxu0 0.0
      %397 = vmatpush1.msra.mxu0 0.0
      %398 = vmatprep.subr.mxu0 0.0
      %399 = vmatpush1.msra.mxu0 0.0
      %400 = vmatprep.subr.mxu0 0.0
      %401 = vmatpush1.msra.mxu0 0.0
      %402 = vmatprep.subr.mxu0 0.0
      %403 = vmatpush1.msra.mxu0 0.0
      %404 = vmatprep.subr.mxu0 0.0
      %405 = vmatpush1.msra.mxu0 0.0
      %406 = vmatprep.subr.mxu0 0.0
      %407 = vmatpush1.msra.mxu0 0.0
      %408 = vmatprep.subr.mxu0 0.0
      %409 = vmatpush1.msra.mxu0 0.0
      %410 = vmatprep.subr.mxu0 0.0
      %411 = vmatpush1.msra.mxu0 0.0
      %412 = vmatprep.subr.mxu0 0.0
      %413 = vmatpush1.msra.mxu0 0.0
      %414 = vmatprep.subr.mxu0 0.0
      %415 = vmatpush1.msra.mxu0 0.0
      %416 = vmatprep.subr.mxu0 0.0
      %417 = vmatpush1.msra.mxu0 0.0
      %418 = vmatprep.subr.mxu0 0.0
      %419 = vmatpush1.msra.mxu0 0.0
      %420 = vmatprep.subr.mxu0 0.0
      %421 = vmatpush1.msra.mxu0 0.0
      %422 = vmatprep.subr.mxu0 0.0
      %423 = vmatpush1.msra.mxu0 %v361
      %424 = vmatprep.subr.mxu0 0.0
      %425 = vmatpush1.msra.mxu0 %v360
      %426 = vmatprep.subr.mxu0 0.0
      %427 = vmatpush2.msra.mxu0 0.0
      %428 = vmatprep.subr.mxu0 0.0
      %429 = vmatpush2.msra.mxu0 0.0
      %430 = vmatprep.subr.mxu0 0.0
      %431 = vmatpush2.msra.mxu0 0.0
      %432 = vmatprep.subr.mxu0 0.0
      %433 = vmatpush2.msra.mxu0 0.0
      %434 = vmatprep.subr.mxu0 0.0
      %435 = vmatpush2.msra.mxu0 0.0
      %436 = vmatprep.subr.mxu0 0.0
      %437 = vmatpush2.msra.mxu0 0.0
      %438 = vmatprep.subr.mxu0 0.0
      %439 = vmatpush2.msra.mxu0 0.0
      %440 = vmatprep.subr.mxu0 0.0
      %441 = vmatpush2.msra.mxu0 0.0
      %442 = vmatprep.subr.mxu0 0.0
      %443 = vmatpush2.msra.mxu0 0.0
      %444 = vmatprep.subr.mxu0 0.0
      %445 = vmatpush2.msra.mxu0 0.0
      %446 = vmatprep.subr.mxu0 0.0
      %447 = vmatpush2.msra.mxu0 0.0
      %448 = vmatprep.subr.mxu0 0.0
      %449 = vmatpush2.msra.mxu0 0.0
      %450 = vmatprep.subr.mxu0 0.0
      %451 = vmatpush2.msra.mxu0 0.0
      %452 = vmatprep.subr.mxu0 0.0
      %453 = vmatpush2.msra.mxu0 0.0
      %454 = vmatprep.subr.mxu0 0.0
      %455 = vmatpush2.msra.mxu0 0.0
      %456 = vmatprep.subr.mxu0 0.0
      %457 = vmatpush2.msra.mxu0 0.0
      %458 = vmatprep.mubr.f32.mxu0 0.0
      %459 = vmatmul.mubr.f32.gmra.mxu0 %v371
      %v460 = vpop.f32.mrf.mxu0
      %v461 = vadd.f32 %v367, %v460
      %v462 = vpop.f32.mrf.mxu0
      %463 = vmatprep.mubr.f32.mxu0 0.0
      %464 = vmatmul.mubr.f32.gmra.mxu0 %v374
      %v465 = vpop.f32.mrf.mxu0
      %v466 = vadd.f32 %v367, %v465
      %v467 = vpop.f32.mrf.mxu0
      %468 = vmatprep.mubr.f32.mxu0 0.0
      %469 = vmatmul.mubr.f32.gmra.mxu0 %v377
      %v470 = vpop.f32.mrf.mxu0
      %v471 = vadd.f32 %v367, %v470
      %v472 = vpop.f32.mrf.mxu0
      %473 = vmatprep.mubr.f32.mxu0 0.0
      %474 = vmatmul.mubr.f32.gmra.mxu0 %v380
      %v475 = vpop.f32.mrf.mxu0
      %v476 = vadd.f32 %v367, %v475
      %v477 = vpop.f32.mrf.mxu0
      %478 = vmatprep.mubr.f32.mxu0 0.0
      %479 = vmatmul.mubr.f32.gmra.mxu0 %v383
      %v480 = vpop.f32.mrf.mxu0
      %v481 = vadd.f32 %v367, %v480
      %v482 = vpop.f32.mrf.mxu0
      %483 = vmatprep.mubr.f32.mxu0 0.0
      %484 = vmatmul.mubr.f32.gmra.mxu0 %v386
      %v485 = vpop.f32.mrf.mxu0
      %v486 = vadd.f32 %v367, %v485
      %v487 = vpop.f32.mrf.mxu0
      %488 = vmatprep.mubr.f32.mxu0 0.0
      %489 = vmatmul.mubr.f32.gmra.mxu0 %v389
      %v490 = vpop.f32.mrf.mxu0
      %v491 = vadd.f32 %v367, %v490
      %v492 = vpop.f32.mrf.mxu0
      %493 = vmatprep.mubr.f32.mxu0 0.0
      %494 = vmatmul.mubr.f32.gmra.mxu0 %v392
      %v495 = vpop.f32.mrf.mxu0
      %v496 = vadd.f32 %v367, %v495
      %v497 = vpop.f32.mrf.mxu0
      %498 = vdwg.mxu0
      %v499 = vld [vmem:[%s3] sm:$0xff]
      %v500 = vld [vmem:[%s3 + $0x8] sm:$0xff]
      %v502 = vsel %vm369, %v499, 0
      %v505 = vsel %vm369, %v500, 0
      %507 = vmatprep.subr.mxu0 0.0
      %508 = vmatpush1.msra.mxu0 0.0
      %509 = vmatprep.subr.mxu0 0.0
      %510 = vmatpush1.msra.mxu0 0.0
      %511 = vmatprep.subr.mxu0 0.0
      %512 = vmatpush1.msra.mxu0 0.0
      %513 = vmatprep.subr.mxu0 0.0
      %514 = vmatpush1.msra.mxu0 0.0
      %515 = vmatprep.subr.mxu0 0.0
      %516 = vmatpush1.msra.mxu0 0.0
      %517 = vmatprep.subr.mxu0 0.0
      %518 = vmatpush1.msra.mxu0 0.0
      %519 = vmatprep.subr.mxu0 0.0
      %520 = vmatpush1.msra.mxu0 0.0
      %521 = vmatprep.subr.mxu0 0.0
      %522 = vmatpush1.msra.mxu0 0.0
      %523 = vmatprep.subr.mxu0 0.0
      %524 = vmatpush1.msra.mxu0 0.0
      %525 = vmatprep.subr.mxu0 0.0
      %526 = vmatpush1.msra.mxu0 0.0
      %527 = vmatprep.subr.mxu0 0.0
      %528 = vmatpush1.msra.mxu0 0.0
      %529 = vmatprep.subr.mxu0 0.0
      %530 = vmatpush1.msra.mxu0 0.0
      %531 = vmatprep.subr.mxu0 0.0
      %532 = vmatpush1.msra.mxu0 0.0
      %533 = vmatprep.subr.mxu0 0.0
      %534 = vmatpush1.msra.mxu0 0.0
      %535 = vmatprep.subr.mxu0 0.0
      %536 = vmatpush1.msra.mxu0 %v353
      %537 = vmatprep.subr.mxu0 0.0
      %538 = vmatpush1.msra.mxu0 %v352
      %539 = vmatprep.subr.mxu0 0.0
      %540 = vmatpush2.msra.mxu0 0.0
      %541 = vmatprep.subr.mxu0 0.0
      %542 = vmatpush2.msra.mxu0 0.0
      %543 = vmatprep.subr.mxu0 0.0
      %544 = vmatpush2.msra.mxu0 0.0
      %545 = vmatprep.subr.mxu0 0.0
      %546 = vmatpush2.msra.mxu0 0.0
      %547 = vmatprep.subr.mxu0 0.0
      %548 = vmatpush2.msra.mxu0 0.0
      %549 = vmatprep.subr.mxu0 0.0
      %550 = vmatpush2.msra.mxu0 0.0
      %551 = vmatprep.subr.mxu0 0.0
      %552 = vmatpush2.msra.mxu0 0.0
      %553 = vmatprep.subr.mxu0 0.0
      %554 = vmatpush2.msra.mxu0 0.0
      %555 = vmatprep.subr.mxu0 0.0
      %556 = vmatpush2.msra.mxu0 0.0
      %557 = vmatprep.subr.mxu0 0.0
      %558 = vmatpush2.msra.mxu0 0.0
      %559 = vmatprep.subr.mxu0 0.0
      %560 = vmatpush2.msra.mxu0 0.0
      %561 = vmatprep.subr.mxu0 0.0
      %562 = vmatpush2.msra.mxu0 0.0
      %563 = vmatprep.subr.mxu0 0.0
      %564 = vmatpush2.msra.mxu0 0.0
      %565 = vmatprep.subr.mxu0 0.0
      %566 = vmatpush2.msra.mxu0 0.0
      %567 = vmatprep.subr.mxu0 0.0
      %568 = vmatpush2.msra.mxu0 0.0
      %569 = vmatprep.subr.mxu0 0.0
      %570 = vmatpush2.msra.mxu0 0.0
      %571 = vmatprep.mubr.f32.mxu0 0.0
      %572 = vmatmul.mubr.f32.gmra.mxu0 %v502
      %v573 = vpop.f32.mrf.mxu0
      %v574 = vadd.f32 0.0, %v573
      %v575 = vpop.f32.mrf.mxu0
      %576 = vmatprep.mubr.f32.mxu0 0.0
      %577 = vmatmul.mubr.f32.gmra.mxu0 %v505
      %v578 = vpop.f32.mrf.mxu0
      %v579 = vadd.f32 0.0, %v578
      %v580 = vpop.f32.mrf.mxu0
      %581 = vdwg.mxu0
      %582 = vmatprep.subr.mxu0 0.0
      %583 = vmatpush1.msra.mxu0 0.0
      %584 = vmatprep.subr.mxu0 0.0
      %585 = vmatpush1.msra.mxu0 0.0
      %586 = vmatprep.subr.mxu0 0.0
      %587 = vmatpush1.msra.mxu0 0.0
      %588 = vmatprep.subr.mxu0 0.0
      %589 = vmatpush1.msra.mxu0 0.0
      %590 = vmatprep.subr.mxu0 0.0
      %591 = vmatpush1.msra.mxu0 0.0
      %592 = vmatprep.subr.mxu0 0.0
      %593 = vmatpush1.msra.mxu0 0.0
      %594 = vmatprep.subr.mxu0 0.0
      %595 = vmatpush1.msra.mxu0 0.0
      %596 = vmatprep.subr.mxu0 0.0
      %597 = vmatpush1.msra.mxu0 0.0
      %598 = vmatprep.subr.mxu0 0.0
      %599 = vmatpush1.msra.mxu0 0.0
      %600 = vmatprep.subr.mxu0 0.0
      %601 = vmatpush1.msra.mxu0 0.0
      %602 = vmatprep.subr.mxu0 0.0
      %603 = vmatpush1.msra.mxu0 0.0
      %604 = vmatprep.subr.mxu0 0.0
      %605 = vmatpush1.msra.mxu0 0.0
      %606 = vmatprep.subr.mxu0 0.0
      %607 = vmatpush1.msra.mxu0 0.0
      %608 = vmatprep.subr.mxu0 0.0
      %609 = vmatpush1.msra.mxu0 0.0
      %610 = vmatprep.subr.mxu0 0.0
      %611 = vmatpush1.msra.mxu0 %v355
      %612 = vmatprep.subr.mxu0 0.0
      %613 = vmatpush1.msra.mxu0 %v354
      %614 = vmatprep.subr.mxu0 0.0
      %615 = vmatpush2.msra.mxu0 0.0
      %616 = vmatprep.subr.mxu0 0.0
      %617 = vmatpush2.msra.mxu0 0.0
      %618 = vmatprep.subr.mxu0 0.0
      %619 = vmatpush2.msra.mxu0 0.0
      %620 = vmatprep.subr.mxu0 0.0
      %621 = vmatpush2.msra.mxu0 0.0
      %622 = vmatprep.subr.mxu0 0.0
      %623 = vmatpush2.msra.mxu0 0.0
      %624 = vmatprep.subr.mxu0 0.0
      %625 = vmatpush2.msra.mxu0 0.0
      %626 = vmatprep.subr.mxu0 0.0
      %627 = vmatpush2.msra.mxu0 0.0
      %628 = vmatprep.subr.mxu0 0.0
      %629 = vmatpush2.msra.mxu0 0.0
      %630 = vmatprep.subr.mxu0 0.0
      %631 = vmatpush2.msra.mxu0 0.0
      %632 = vmatprep.subr.mxu0 0.0
      %633 = vmatpush2.msra.mxu0 0.0
      %634 = vmatprep.subr.mxu0 0.0
      %635 = vmatpush2.msra.mxu0 0.0
      %636 = vmatprep.subr.mxu0 0.0
      %637 = vmatpush2.msra.mxu0 0.0
      %638 = vmatprep.subr.mxu0 0.0
      %639 = vmatpush2.msra.mxu0 0.0
      %640 = vmatprep.subr.mxu0 0.0
      %641 = vmatpush2.msra.mxu0 0.0
      %642 = vmatprep.subr.mxu0 0.0
      %643 = vmatpush2.msra.mxu0 0.0
      %644 = vmatprep.subr.mxu0 0.0
      %645 = vmatpush2.msra.mxu0 0.0
      %646 = vmatprep.mubr.f32.mxu0 0.0
      %647 = vmatmul.mubr.f32.gmra.mxu0 %v502
      %v648 = vpop.f32.mrf.mxu0
      %v649 = vadd.f32 0.0, %v648
      %v650 = vpop.f32.mrf.mxu0
      %651 = vmatprep.mubr.f32.mxu0 0.0
      %652 = vmatmul.mubr.f32.gmra.mxu0 %v505
      %v653 = vpop.f32.mrf.mxu0
      %v654 = vadd.f32 0.0, %v653
      %v655 = vpop.f32.mrf.mxu0
      %656 = vdwg.mxu0
      %657 = vmatprep.subr.mxu0 0.0
      %658 = vmatpush1.msra.mxu0 0.0
      %659 = vmatprep.subr.mxu0 0.0
      %660 = vmatpush1.msra.mxu0 0.0
      %661 = vmatprep.subr.mxu0 0.0
      %662 = vmatpush1.msra.mxu0 0.0
      %663 = vmatprep.subr.mxu0 0.0
      %664 = vmatpush1.msra.mxu0 0.0
      %665 = vmatprep.subr.mxu0 0.0
      %666 = vmatpush1.msra.mxu0 0.0
      %667 = vmatprep.subr.mxu0 0.0
      %668 = vmatpush1.msra.mxu0 0.0
      %669 = vmatprep.subr.mxu0 0.0
      %670 = vmatpush1.msra.mxu0 0.0
      %671 = vmatprep.subr.mxu0 0.0
      %672 = vmatpush1.msra.mxu0 0.0
      %673 = vmatprep.subr.mxu0 0.0
      %674 = vmatpush1.msra.mxu0 0.0
      %675 = vmatprep.subr.mxu0 0.0
      %676 = vmatpush1.msra.mxu0 0.0
      %677 = vmatprep.subr.mxu0 0.0
      %678 = vmatpush1.msra.mxu0 0.0
      %679 = vmatprep.subr.mxu0 0.0
      %680 = vmatpush1.msra.mxu0 0.0
      %681 = vmatprep.subr.mxu0 0.0
      %682 = vmatpush1.msra.mxu0 0.0
      %683 = vmatprep.subr.mxu0 0.0
      %684 = vmatpush1.msra.mxu0 0.0
      %685 = vmatprep.subr.mxu0 0.0
      %686 = vmatpush1.msra.mxu0 %v357
      %687 = vmatprep.subr.mxu0 0.0
      %688 = vmatpush1.msra.mxu0 %v356
      %689 = vmatprep.subr.mxu0 0.0
      %690 = vmatpush2.msra.mxu0 0.0
      %691 = vmatprep.subr.mxu0 0.0
      %692 = vmatpush2.msra.mxu0 0.0
      %693 = vmatprep.subr.mxu0 0.0
      %694 = vmatpush2.msra.mxu0 0.0
      %695 = vmatprep.subr.mxu0 0.0
      %696 = vmatpush2.msra.mxu0 0.0
      %697 = vmatprep.subr.mxu0 0.0
      %698 = vmatpush2.msra.mxu0 0.0
      %699 = vmatprep.subr.mxu0 0.0
      %700 = vmatpush2.msra.mxu0 0.0
      %701 = vmatprep.subr.mxu0 0.0
      %702 = vmatpush2.msra.mxu0 0.0
      %703 = vmatprep.subr.mxu0 0.0
      %704 = vmatpush2.msra.mxu0 0.0
      %705 = vmatprep.subr.mxu0 0.0
      %706 = vmatpush2.msra.mxu0 0.0
      %707 = vmatprep.subr.mxu0 0.0
      %708 = vmatpush2.msra.mxu0 0.0
      %709 = vmatprep.subr.mxu0 0.0
      %710 = vmatpush2.msra.mxu0 0.0
      %711 = vmatprep.subr.mxu0 0.0
      %712 = vmatpush2.msra.mxu0 0.0
      %713 = vmatprep.subr.mxu0 0.0
      %714 = vmatpush2.msra.mxu0 0.0
      %715 = vmatprep.subr.mxu0 0.0
      %716 = vmatpush2.msra.mxu0 0.0
      %717 = vmatprep.subr.mxu0 0.0
      %718 = vmatpush2.msra.mxu0 0.0
      %719 = vmatprep.subr.mxu0 0.0
      %720 = vmatpush2.msra.mxu0 0.0
      %721 = vmatprep.mubr.f32.mxu0 0.0
      %722 = vmatmul.mubr.f32.gmra.mxu0 %v502
      %v723 = vpop.f32.mrf.mxu0
      %v724 = vadd.f32 0.0, %v723
      %v725 = vpop.f32.mrf.mxu0
      %726 = vmatprep.mubr.f32.mxu0 0.0
      %727 = vmatmul.mubr.f32.gmra.mxu0 %v505
      %v728 = vpop.f32.mrf.mxu0
      %v729 = vadd.f32 0.0, %v728
      %v730 = vpop.f32.mrf.mxu0
      %731 = vdwg.mxu0
      %732 = vmatprep.subr.mxu0 0.0
      %733 = vmatpush1.msra.mxu0 0.0
      %734 = vmatprep.subr.mxu0 0.0
      %735 = vmatpush1.msra.mxu0 0.0
      %736 = vmatprep.subr.mxu0 0.0
      %737 = vmatpush1.msra.mxu0 0.0
      %738 = vmatprep.subr.mxu0 0.0
      %739 = vmatpush1.msra.mxu0 0.0
      %740 = vmatprep.subr.mxu0 0.0
      %741 = vmatpush1.msra.mxu0 0.0
      %742 = vmatprep.subr.mxu0 0.0
      %743 = vmatpush1.msra.mxu0 0.0
      %744 = vmatprep.subr.mxu0 0.0
      %745 = vmatpush1.msra.mxu0 0.0
      %746 = vmatprep.subr.mxu0 0.0
      %747 = vmatpush1.msra.mxu0 0.0
      %748 = vmatprep.subr.mxu0 0.0
      %749 = vmatpush1.msra.mxu0 0.0
      %750 = vmatprep.subr.mxu0 0.0
      %751 = vmatpush1.msra.mxu0 0.0
      %752 = vmatprep.subr.mxu0 0.0
      %753 = vmatpush1.msra.mxu0 0.0
      %754 = vmatprep.subr.mxu0 0.0
      %755 = vmatpush1.msra.mxu0 0.0
      %756 = vmatprep.subr.mxu0 0.0
      %757 = vmatpush1.msra.mxu0 0.0
      %758 = vmatprep.subr.mxu0 0.0
      %759 = vmatpush1.msra.mxu0 0.0
      %760 = vmatprep.subr.mxu0 0.0
      %761 = vmatpush1.msra.mxu0 %v359
      %762 = vmatprep.subr.mxu0 0.0
      %763 = vmatpush1.msra.mxu0 %v358
      %764 = vmatprep.subr.mxu0 0.0
      %765 = vmatpush2.msra.mxu0 0.0
      %766 = vmatprep.subr.mxu0 0.0
      %767 = vmatpush2.msra.mxu0 0.0
      %768 = vmatprep.subr.mxu0 0.0
      %769 = vmatpush2.msra.mxu0 0.0
      %770 = vmatprep.subr.mxu0 0.0
      %771 = vmatpush2.msra.mxu0 0.0
      %772 = vmatprep.subr.mxu0 0.0
      %773 = vmatpush2.msra.mxu0 0.0
      %774 = vmatprep.subr.mxu0 0.0
      %775 = vmatpush2.msra.mxu0 0.0
      %776 = vmatprep.subr.mxu0 0.0
      %777 = vmatpush2.msra.mxu0 0.0
      %778 = vmatprep.subr.mxu0 0.0
      %779 = vmatpush2.msra.mxu0 0.0
      %780 = vmatprep.subr.mxu0 0.0
      %781 = vmatpush2.msra.mxu0 0.0
      %782 = vmatprep.subr.mxu0 0.0
      %783 = vmatpush2.msra.mxu0 0.0
      %784 = vmatprep.subr.mxu0 0.0
      %785 = vmatpush2.msra.mxu0 0.0
      %786 = vmatprep.subr.mxu0 0.0
      %787 = vmatpush2.msra.mxu0 0.0
      %788 = vmatprep.subr.mxu0 0.0
      %789 = vmatpush2.msra.mxu0 0.0
      %790 = vmatprep.subr.mxu0 0.0
      %791 = vmatpush2.msra.mxu0 0.0
      %792 = vmatprep.subr.mxu0 0.0
      %793 = vmatpush2.msra.mxu0 0.0
      %794 = vmatprep.subr.mxu0 0.0
      %795 = vmatpush2.msra.mxu0 0.0
      %796 = vmatprep.mubr.f32.mxu0 0.0
      %797 = vmatmul.mubr.f32.gmra.mxu0 %v502
      %v798 = vpop.f32.mrf.mxu0
      %v799 = vadd.f32 0.0, %v798
      %v800 = vpop.f32.mrf.mxu0
      %801 = vmatprep.mubr.f32.mxu0 0.0
      %802 = vmatmul.mubr.f32.gmra.mxu0 %v505
      %v803 = vpop.f32.mrf.mxu0
      %v804 = vadd.f32 0.0, %v803
      %v805 = vpop.f32.mrf.mxu0
      %806 = vdwg.mxu0
      %v807 = vld [vmem:[%s4] sm:$0xff]
      %v808 = vld [vmem:[%s4 + $0x8] sm:$0xff]
      %810 = vset.pattern.permute.xlu0 0
      %811 = vperm.xlu0 %810, %v807
      %v812 = vpop.permute.xlu0 %811
      %815 = vset.pattern.permute.xlu0 0
      %816 = vperm.xlu0 %815, %v808
      %v817 = vpop.permute.xlu0 %816
      %v819 = vadd.f32 %v574, %v812
      %v820 = vadd.f32 %v579, %v817
      %v821 = vadd.f32 %v649, %v812
      %v822 = vadd.f32 %v654, %v817
      %v823 = vadd.f32 %v724, %v812
      %v824 = vadd.f32 %v729, %v817
      %v825 = vadd.f32 %v799, %v812
      %v826 = vadd.f32 %v804, %v817
      %v827 = vadd.f32 %v461, %v819
      %v828 = vadd.f32 %v466, %v820
      %v829 = vadd.f32 %v471, %v821
      %v830 = vadd.f32 %v476, %v822
      %v831 = vadd.f32 %v481, %v823
      %v832 = vadd.f32 %v486, %v824
      %v833 = vadd.f32 %v491, %v825
      %v834 = vadd.f32 %v496, %v826
      %v835 = vmul.f32 %v827, %v827
      %v836 = vmul.f32 %v828, %v828
      %v837 = vmul.f32 %v829, %v829
      %v838 = vmul.f32 %v830, %v830
      %v839 = vmul.f32 %v831, %v831
      %v840 = vmul.f32 %v832, %v832
      %v841 = vmul.f32 %v833, %v833
      %v842 = vmul.f32 %v834, %v834
      %v843 = vmul.f32 %v827, %v835
      %v844 = vmul.f32 %v828, %v836
      %v845 = vmul.f32 %v829, %v837
      %v846 = vmul.f32 %v830, %v838
      %v847 = vmul.f32 %v831, %v839
      %v848 = vmul.f32 %v832, %v840
      %v849 = vmul.f32 %v833, %v841
      %v850 = vmul.f32 %v834, %v842
      %v851 = vmul.f32 %v843, 0.044715
      %v852 = vmul.f32 %v844, 0.044715
      %v853 = vmul.f32 %v845, 0.044715
      %v854 = vmul.f32 %v846, 0.044715
      %v855 = vmul.f32 %v847, 0.044715
      %v856 = vmul.f32 %v848, 0.044715
      %v857 = vmul.f32 %v849, 0.044715
      %v858 = vmul.f32 %v850, 0.044715
      %v859 = vadd.f32 %v827, %v851
      %v860 = vadd.f32 %v828, %v852
      %v861 = vadd.f32 %v829, %v853
      %v862 = vadd.f32 %v830, %v854
      %v863 = vadd.f32 %v831, %v855
      %v864 = vadd.f32 %v832, %v856
      %v865 = vadd.f32 %v833, %v857
      %v866 = vadd.f32 %v834, %v858
      %v867 = vmul.f32 %v859, 0.7978846
      %v868 = vmul.f32 %v860, 0.7978846
      %v869 = vmul.f32 %v861, 0.7978846
      %v870 = vmul.f32 %v862, 0.7978846
      %v871 = vmul.f32 %v863, 0.7978846
      %v872 = vmul.f32 %v864, 0.7978846
      %v873 = vmul.f32 %v865, 0.7978846
      %v874 = vmul.f32 %v866, 0.7978846
      %v875 = vtanh.pop %v867
      %v876 = vtanh.pop %v868
      %v877 = vtanh.pop %v869
      %v878 = vtanh.pop %v870
      %v879 = vtanh.pop %v871
      %v880 = vtanh.pop %v872
      %v881 = vtanh.pop %v873
      %v882 = vtanh.pop %v874
      %v883 = vadd.f32 %v875, 1.0
      %v884 = vadd.f32 %v876, 1.0
      %v885 = vadd.f32 %v877, 1.0
      %v886 = vadd.f32 %v878, 1.0
      %v887 = vadd.f32 %v879, 1.0
      %v888 = vadd.f32 %v880, 1.0
      %v889 = vadd.f32 %v881, 1.0
      %v890 = vadd.f32 %v882, 1.0
      %v891 = vmul.f32 %v883, 0.5
      %v892 = vmul.f32 %v884, 0.5
      %v893 = vmul.f32 %v885, 0.5
      %v894 = vmul.f32 %v886, 0.5
      %v895 = vmul.f32 %v887, 0.5
      %v896 = vmul.f32 %v888, 0.5
      %v897 = vmul.f32 %v889, 0.5
      %v898 = vmul.f32 %v890, 0.5
      %v899 = vmul.f32 %v827, %v891
      %v900 = vmul.f32 %v828, %v892
      %v901 = vmul.f32 %v829, %v893
      %v902 = vmul.f32 %v830, %v894
      %v903 = vmul.f32 %v831, %v895
      %v904 = vmul.f32 %v832, %v896
      %v905 = vmul.f32 %v833, %v897
      %v906 = vmul.f32 %v834, %v898
      %v907 = vld [vmem:[%s337] sm:$0xf]
      %v910 = vunpack.c.l.s4 1966171168
      %v911 = vunpack.c.0.s8 %v910
      %v912 = vlaneseq
      %v913 = vshrl.u32 %v912, 7
      %v914 = vsub.s32 %v911, %v913
      %v915 = vrot.slane %v907, %v914
      %v916 = vcombine.high %v915, %v915
      %v918 = vunpack.c.l.s4 1966171168
      %v919 = vunpack.c.0.s8 %v918
      %v920 = vlaneseq
      %v921 = vshrl.u32 %v920, 7
      %v922 = vsub.s32 %v919, %v921
      %v923 = vrot.slane %v915, %v922
      %v925 = vunpack.c.l.s4 1966171168
      %v926 = vunpack.c.0.s8 %v925
      %v927 = vlaneseq
      %v928 = vshrl.u32 %v927, 7
      %v929 = vsub.s32 %v926, %v928
      %v930 = vrot.slane %v916, %v929
      %v931 = vcombine.high %v923, %v923
      %v932 = vcombine.high %v930, %v930
      %v933 = vlaneseq
      %v934 = vshrl.u32 %v933, 7
      %v935 = vadd.s32 %v934, 8
      %v936 = vlaneseq
      %v937 = vand.u32 %v936, 127
      %vm938 = vcmp.ge.s32.totalorder %v934, 1
      %vm939 = vcmp.ge.s32.totalorder %v935, 1
      %v940 = vrot.slane %v352, 7
      %v941 = vrot.slane %v354, 7
      %v942 = vrot.slane %v356, 7
      %v943 = vrot.slane %v358, 7
      %v944 = vrot.slane %v353, 7
      %v945 = vrot.slane %v355, 7
      %v946 = vrot.slane %v357, 7
      %v947 = vrot.slane %v359, 7
      %vm948 = vcmp.lt.s32.totalorder %v934, 1
      %v949 = vsel %vm948, %v940, %v944
      %v950 = vsel %vm948, %v941, %v945
      %v951 = vsel %vm948, %v942, %v946
      %v952 = vsel %vm948, %v943, %v947
      %v953 = vsel %vm948, %v944, %v940
      %v954 = vsel %vm948, %v945, %v941
      %v955 = vsel %vm948, %v946, %v942
      %v956 = vsel %vm948, %v947, %v943
      %v957 = vsel %vm938, %v953, 0.0
      %v958 = vsel %vm939, %v949, 0.0
      %v959 = vsel %vm938, %v954, 0.0
      %v960 = vsel %vm939, %v950, 0.0
      %v961 = vsel %vm938, %v955, 0.0
      %v962 = vsel %vm939, %v951, 0.0
      %v963 = vsel %vm938, %v956, 0.0
      %v964 = vsel %vm939, %v952, 0.0
      %vm965 = vcmp.lt.s32.totalorder %v934, 15
      %vm966 = vcmp.lt.s32.totalorder %v935, 15
      %v967 = vrot.slane %v352, 1
      %v968 = vrot.slane %v354, 1
      %v969 = vrot.slane %v356, 1
      %v970 = vrot.slane %v358, 1
      %v971 = vrot.slane %v353, 1
      %v972 = vrot.slane %v355, 1
      %v973 = vrot.slane %v357, 1
      %v974 = vrot.slane %v359, 1
      %vm975 = vcmp.lt.s32.totalorder %v934, 7
      %v976 = vsel %vm975, %v967, %v971
      %v977 = vsel %vm975, %v968, %v972
      %v978 = vsel %vm975, %v969, %v973
      %v979 = vsel %vm975, %v970, %v974
      %v980 = vsel %vm975, %v971, %v967
      %v981 = vsel %vm975, %v972, %v968
      %v982 = vsel %vm975, %v973, %v969
      %v983 = vsel %vm975, %v974, %v970
      %v984 = vsel %vm965, %v976, 0.0
      %v985 = vsel %vm966, %v980, 0.0
      %v986 = vsel %vm965, %v977, 0.0
      %v987 = vsel %vm966, %v981, 0.0
      %v988 = vsel %vm965, %v978, 0.0
      %v989 = vsel %vm966, %v982, 0.0
      %v990 = vsel %vm965, %v979, 0.0
      %v991 = vsel %vm966, %v983, 0.0
      %v992 = vlaneseq
      %v993 = vshrl.u32 %v992, 7
      %v994 = vsub.s32 0, %v993
      %v995 = vrot.slane %v923, %v994
      %v996 = vlaneseq
      %v997 = vshrl.u32 %v996, 7
      %v998 = vsub.s32 0, %v997
      %v999 = vrot.slane %v930, %v998
      %v1000 = vlaneseq
      %v1001 = vshrl.u32 %v1000, 7
      %v1002 = vsub.s32 0, %v1001
      %v1003 = vrot.slane %v931, %v1002
      %v1004 = vlaneseq
      %v1005 = vshrl.u32 %v1004, 7
      %v1006 = vsub.s32 0, %v1005
      %v1007 = vrot.slane %v932, %v1006
      %1008 = vset.pattern.permute.xlu0 0
      %1009 = vperm.xlu0 %1008, %v995
      %v1010 = vpop.permute.xlu0 %1009
      %1012 = vset.pattern.permute.xlu0 0
      %1013 = vperm.xlu0 %1012, %v999
      %v1014 = vpop.permute.xlu0 %1013
      %1016 = vset.pattern.permute.xlu0 0
      %1017 = vperm.xlu0 %1016, %v1003
      %v1018 = vpop.permute.xlu0 %1017
      %1020 = vset.pattern.permute.xlu0 0
      %1021 = vperm.xlu0 %1020, %v1007
      %v1022 = vpop.permute.xlu0 %1021
      %v1024 = vmul.f32 %v1010, %v957
      %v1025 = vmul.f32 %v1010, %v958
      %v1026 = vmul.f32 %v1014, %v959
      %v1027 = vmul.f32 %v1014, %v960
      %v1028 = vmul.f32 %v1018, %v961
      %v1029 = vmul.f32 %v1018, %v962
      %v1030 = vmul.f32 %v1022, %v963
      %v1031 = vmul.f32 %v1022, %v964
      %1032 = vset.pattern.permute.xlu0 3
      %1033 = vperm.xlu0 %1032, %v995
      %v1034 = vpop.permute.xlu0 %1033
      %1036 = vset.pattern.permute.xlu0 3
      %1037 = vperm.xlu0 %1036, %v999
      %v1038 = vpop.permute.xlu0 %1037
      %1040 = vset.pattern.permute.xlu0 3
      %1041 = vperm.xlu0 %1040, %v1003
      %v1042 = vpop.permute.xlu0 %1041
      %1044 = vset.pattern.permute.xlu0 3
      %1045 = vperm.xlu0 %1044, %v1007
      %v1046 = vpop.permute.xlu0 %1045
      %v1048 = vmul.f32 %v1034, %v352
      %v1049 = vmul.f32 %v1034, %v353
      %v1050 = vmul.f32 %v1038, %v354
      %v1051 = vmul.f32 %v1038, %v355
      %v1052 = vmul.f32 %v1042, %v356
      %v1053 = vmul.f32 %v1042, %v357
      %v1054 = vmul.f32 %v1046, %v358
      %v1055 = vmul.f32 %v1046, %v359
      %v1056 = vadd.f32 %v1024, %v1048
      %v1057 = vadd.f32 %v1025, %v1049
      %v1058 = vadd.f32 %v1026, %v1050
      %v1059 = vadd.f32 %v1027, %v1051
      %v1060 = vadd.f32 %v1028, %v1052
      %v1061 = vadd.f32 %v1029, %v1053
      %v1062 = vadd.f32 %v1030, %v1054
      %v1063 = vadd.f32 %v1031, %v1055
      %1064 = vset.pattern.permute.xlu0 6
      %1065 = vperm.xlu0 %1064, %v995
      %v1066 = vpop.permute.xlu0 %1065
      %1068 = vset.pattern.permute.xlu0 6
      %1069 = vperm.xlu0 %1068, %v999
      %v1070 = vpop.permute.xlu0 %1069
      %1072 = vset.pattern.permute.xlu0 6
      %1073 = vperm.xlu0 %1072, %v1003
      %v1074 = vpop.permute.xlu0 %1073
      %1076 = vset.pattern.permute.xlu0 6
      %1077 = vperm.xlu0 %1076, %v1007
      %v1078 = vpop.permute.xlu0 %1077
      %v1080 = vmul.f32 %v1066, %v984
      %v1081 = vmul.f32 %v1066, %v985
      %v1082 = vmul.f32 %v1070, %v986
      %v1083 = vmul.f32 %v1070, %v987
      %v1084 = vmul.f32 %v1074, %v988
      %v1085 = vmul.f32 %v1074, %v989
      %v1086 = vmul.f32 %v1078, %v990
      %v1087 = vmul.f32 %v1078, %v991
      %v1088 = vadd.f32 %v1056, %v1080
      %v1089 = vadd.f32 %v1057, %v1081
      %v1090 = vadd.f32 %v1058, %v1082
      %v1091 = vadd.f32 %v1059, %v1083
      %v1092 = vadd.f32 %v1060, %v1084
      %v1093 = vadd.f32 %v1061, %v1085
      %v1094 = vadd.f32 %v1062, %v1086
      %v1095 = vadd.f32 %v1063, %v1087
      %1096 = vset.pattern.permute.xlu0 1
      %1097 = vperm.xlu0 %1096, %v995
      %v1098 = vpop.permute.xlu0 %1097
      %1100 = vset.pattern.permute.xlu0 1
      %1101 = vperm.xlu0 %1100, %v999
      %v1102 = vpop.permute.xlu0 %1101
      %1104 = vset.pattern.permute.xlu0 1
      %1105 = vperm.xlu0 %1104, %v1003
      %v1106 = vpop.permute.xlu0 %1105
      %1108 = vset.pattern.permute.xlu0 1
      %1109 = vperm.xlu0 %1108, %v1007
      %v1110 = vpop.permute.xlu0 %1109
      %v1112 = vmul.f32 %v1098, %v957
      %v1113 = vmul.f32 %v1098, %v958
      %v1114 = vmul.f32 %v1102, %v959
      %v1115 = vmul.f32 %v1102, %v960
      %v1116 = vmul.f32 %v1106, %v961
      %v1117 = vmul.f32 %v1106, %v962
      %v1118 = vmul.f32 %v1110, %v963
      %v1119 = vmul.f32 %v1110, %v964
      %1120 = vset.pattern.permute.xlu0 4
      %1121 = vperm.xlu0 %1120, %v995
      %v1122 = vpop.permute.xlu0 %1121
      %1124 = vset.pattern.permute.xlu0 4
      %1125 = vperm.xlu0 %1124, %v999
      %v1126 = vpop.permute.xlu0 %1125
      %1128 = vset.pattern.permute.xlu0 4
      %1129 = vperm.xlu0 %1128, %v1003
      %v1130 = vpop.permute.xlu0 %1129
      %1132 = vset.pattern.permute.xlu0 4
      %1133 = vperm.xlu0 %1132, %v1007
      %v1134 = vpop.permute.xlu0 %1133
      %v1136 = vmul.f32 %v1122, %v352
      %v1137 = vmul.f32 %v1122, %v353
      %v1138 = vmul.f32 %v1126, %v354
      %v1139 = vmul.f32 %v1126, %v355
      %v1140 = vmul.f32 %v1130, %v356
      %v1141 = vmul.f32 %v1130, %v357
      %v1142 = vmul.f32 %v1134, %v358
      %v1143 = vmul.f32 %v1134, %v359
      %v1144 = vadd.f32 %v1112, %v1136
      %v1145 = vadd.f32 %v1113, %v1137
      %v1146 = vadd.f32 %v1114, %v1138
      %v1147 = vadd.f32 %v1115, %v1139
      %v1148 = vadd.f32 %v1116, %v1140
      %v1149 = vadd.f32 %v1117, %v1141
      %v1150 = vadd.f32 %v1118, %v1142
      %v1151 = vadd.f32 %v1119, %v1143
      %1152 = vset.pattern.permute.xlu0 7
      %1153 = vperm.xlu0 %1152, %v995
      %v1154 = vpop.permute.xlu0 %1153
      %1156 = vset.pattern.permute.xlu0 7
      %1157 = vperm.xlu0 %1156, %v999
      %v1158 = vpop.permute.xlu0 %1157
      %1160 = vset.pattern.permute.xlu0 7
      %1161 = vperm.xlu0 %1160, %v1003
      %v1162 = vpop.permute.xlu0 %1161
      %1164 = vset.pattern.permute.xlu0 7
      %1165 = vperm.xlu0 %1164, %v1007
      %v1166 = vpop.permute.xlu0 %1165
      %v1168 = vmul.f32 %v1154, %v984
      %v1169 = vmul.f32 %v1154, %v985
      %v1170 = vmul.f32 %v1158, %v986
      %v1171 = vmul.f32 %v1158, %v987
      %v1172 = vmul.f32 %v1162, %v988
      %v1173 = vmul.f32 %v1162, %v989
      %v1174 = vmul.f32 %v1166, %v990
      %v1175 = vmul.f32 %v1166, %v991
      %v1176 = vadd.f32 %v1144, %v1168
      %v1177 = vadd.f32 %v1145, %v1169
      %v1178 = vadd.f32 %v1146, %v1170
      %v1179 = vadd.f32 %v1147, %v1171
      %v1180 = vadd.f32 %v1148, %v1172
      %v1181 = vadd.f32 %v1149, %v1173
      %v1182 = vadd.f32 %v1150, %v1174
      %v1183 = vadd.f32 %v1151, %v1175
      %1184 = vset.pattern.permute.xlu0 2
      %1185 = vperm.xlu0 %1184, %v995
      %v1186 = vpop.permute.xlu0 %1185
      %1188 = vset.pattern.permute.xlu0 2
      %1189 = vperm.xlu0 %1188, %v999
      %v1190 = vpop.permute.xlu0 %1189
      %1192 = vset.pattern.permute.xlu0 2
      %1193 = vperm.xlu0 %1192, %v1003
      %v1194 = vpop.permute.xlu0 %1193
      %1196 = vset.pattern.permute.xlu0 2
      %1197 = vperm.xlu0 %1196, %v1007
      %v1198 = vpop.permute.xlu0 %1197
      %v1200 = vmul.f32 %v1186, %v957
      %v1201 = vmul.f32 %v1186, %v958
      %v1202 = vmul.f32 %v1190, %v959
      %v1203 = vmul.f32 %v1190, %v960
      %v1204 = vmul.f32 %v1194, %v961
      %v1205 = vmul.f32 %v1194, %v962
      %v1206 = vmul.f32 %v1198, %v963
      %v1207 = vmul.f32 %v1198, %v964
      %1208 = vset.pattern.permute.xlu0 5
      %1209 = vperm.xlu0 %1208, %v995
      %v1210 = vpop.permute.xlu0 %1209
      %1212 = vset.pattern.permute.xlu0 5
      %1213 = vperm.xlu0 %1212, %v999
      %v1214 = vpop.permute.xlu0 %1213
      %1216 = vset.pattern.permute.xlu0 5
      %1217 = vperm.xlu0 %1216, %v1003
      %v1218 = vpop.permute.xlu0 %1217
      %1220 = vset.pattern.permute.xlu0 5
      %1221 = vperm.xlu0 %1220, %v1007
      %v1222 = vpop.permute.xlu0 %1221
      %v1224 = vmul.f32 %v1210, %v352
      %v1225 = vmul.f32 %v1210, %v353
      %v1226 = vmul.f32 %v1214, %v354
      %v1227 = vmul.f32 %v1214, %v355
      %v1228 = vmul.f32 %v1218, %v356
      %v1229 = vmul.f32 %v1218, %v357
      %v1230 = vmul.f32 %v1222, %v358
      %v1231 = vmul.f32 %v1222, %v359
      %v1232 = vadd.f32 %v1200, %v1224
      %v1233 = vadd.f32 %v1201, %v1225
      %v1234 = vadd.f32 %v1202, %v1226
      %v1235 = vadd.f32 %v1203, %v1227
      %v1236 = vadd.f32 %v1204, %v1228
      %v1237 = vadd.f32 %v1205, %v1229
      %v1238 = vadd.f32 %v1206, %v1230
      %v1239 = vadd.f32 %v1207, %v1231
      %1240 = vset.pattern.permute.xlu0 8
      %1241 = vperm.xlu0 %1240, %v995
      %v1242 = vpop.permute.xlu0 %1241
      %1244 = vset.pattern.permute.xlu0 8
      %1245 = vperm.xlu0 %1244, %v999
      %v1246 = vpop.permute.xlu0 %1245
      %1248 = vset.pattern.permute.xlu0 8
      %1249 = vperm.xlu0 %1248, %v1003
      %v1250 = vpop.permute.xlu0 %1249
      %1252 = vset.pattern.permute.xlu0 8
      %1253 = vperm.xlu0 %1252, %v1007
      %v1254 = vpop.permute.xlu0 %1253
      %v1256 = vmul.f32 %v1242, %v984
      %v1257 = vmul.f32 %v1242, %v985
      %v1258 = vmul.f32 %v1246, %v986
      %v1259 = vmul.f32 %v1246, %v987
      %v1260 = vmul.f32 %v1250, %v988
      %v1261 = vmul.f32 %v1250, %v989
      %v1262 = vmul.f32 %v1254, %v990
      %v1263 = vmul.f32 %v1254, %v991
      %v1264 = vadd.f32 %v1232, %v1256
      %v1265 = vadd.f32 %v1233, %v1257
      %v1266 = vadd.f32 %v1234, %v1258
      %v1267 = vadd.f32 %v1235, %v1259
      %v1268 = vadd.f32 %v1236, %v1260
      %v1269 = vadd.f32 %v1237, %v1261
      %v1270 = vadd.f32 %v1238, %v1262
      %v1271 = vadd.f32 %v1239, %v1263
      %vm1272 = vcmp.ge.s32.totalorder %v937, 1
      %vm1273 = vcmask 1047680
      %1274 = vrot.lane.b32.xlu0 %v1088, 16
      %v1275 = vpop.permute.xlu0 %1274
      %v1276 = vsel %vm1273, %v1275, %v1088
      %1277 = vrot.lane.b32.xlu0 %v1089, 16
      %v1278 = vpop.permute.xlu0 %1277
      %v1279 = vsel %vm1273, %v1278, %v1089
      %1280 = vrot.lane.b32.xlu0 %v1090, 16
      %v1281 = vpop.permute.xlu0 %1280
      %v1282 = vsel %vm1273, %v1281, %v1090
      %1283 = vrot.lane.b32.xlu0 %v1091, 16
      %v1284 = vpop.permute.xlu0 %1283
      %v1285 = vsel %vm1273, %v1284, %v1091
      %1286 = vrot.lane.b32.xlu0 %v1092, 16
      %v1287 = vpop.permute.xlu0 %1286
      %v1288 = vsel %vm1273, %v1287, %v1092
      %1289 = vrot.lane.b32.xlu0 %v1093, 16
      %v1290 = vpop.permute.xlu0 %1289
      %v1291 = vsel %vm1273, %v1290, %v1093
      %1292 = vrot.lane.b32.xlu0 %v1094, 16
      %v1293 = vpop.permute.xlu0 %1292
      %v1294 = vsel %vm1273, %v1293, %v1094
      %1295 = vrot.lane.b32.xlu0 %v1095, 16
      %v1296 = vpop.permute.xlu0 %1295
      %v1297 = vsel %vm1273, %v1296, %v1095
      %1298 = vrot.lane.b32.xlu0 %v1276, 16
      %v1299 = vpop.permute.xlu0 %1298
      %1300 = vrot.lane.b32.xlu0 %v1279, 16
      %v1301 = vpop.permute.xlu0 %1300
      %1302 = vrot.lane.b32.xlu0 %v1282, 16
      %v1303 = vpop.permute.xlu0 %1302
      %1304 = vrot.lane.b32.xlu0 %v1285, 16
      %v1305 = vpop.permute.xlu0 %1304
      %1306 = vrot.lane.b32.xlu0 %v1288, 16
      %v1307 = vpop.permute.xlu0 %1306
      %1308 = vrot.lane.b32.xlu0 %v1291, 16
      %v1309 = vpop.permute.xlu0 %1308
      %1310 = vrot.lane.b32.xlu0 %v1294, 16
      %v1311 = vpop.permute.xlu0 %1310
      %1312 = vrot.lane.b32.xlu0 %v1297, 16
      %v1313 = vpop.permute.xlu0 %1312
      %v1314 = vsel %vm1273, %v1299, %v1088
      %v1315 = vsel %vm1273, %v1301, %v1089
      %v1316 = vsel %vm1273, %v1303, %v1090
      %v1317 = vsel %vm1273, %v1305, %v1091
      %v1318 = vsel %vm1273, %v1307, %v1092
      %v1319 = vsel %vm1273, %v1309, %v1093
      %v1320 = vsel %vm1273, %v1311, %v1094
      %v1321 = vsel %vm1273, %v1313, %v1095
      %1330 = vrot.lane.b32.xlu0 %v1314, 113
      %v1331 = vpop.permute.xlu0 %1330
      %1332 = vrot.lane.b32.xlu0 %v1315, 113
      %v1333 = vpop.permute.xlu0 %1332
      %1334 = vrot.lane.b32.xlu0 %v1316, 113
      %v1335 = vpop.permute.xlu0 %1334
      %1336 = vrot.lane.b32.xlu0 %v1317, 113
      %v1337 = vpop.permute.xlu0 %1336
      %1338 = vrot.lane.b32.xlu0 %v1318, 113
      %v1339 = vpop.permute.xlu0 %1338
      %1340 = vrot.lane.b32.xlu0 %v1319, 113
      %v1341 = vpop.permute.xlu0 %1340
      %1342 = vrot.lane.b32.xlu0 %v1320, 113
      %v1343 = vpop.permute.xlu0 %1342
      %1344 = vrot.lane.b32.xlu0 %v1321, 113
      %v1345 = vpop.permute.xlu0 %1344
      %v1354 = vsel %vm1272, %v1331, 0.0
      %v1355 = vsel %vm1272, %v1333, 0.0
      %v1356 = vsel %vm1272, %v1335, 0.0
      %v1357 = vsel %vm1272, %v1337, 0.0
      %v1358 = vsel %vm1272, %v1339, 0.0
      %v1359 = vsel %vm1272, %v1341, 0.0
      %v1360 = vsel %vm1272, %v1343, 0.0
      %v1361 = vsel %vm1272, %v1345, 0.0
      %v1362 = vadd.f32 %v1176, %v1354
      %v1363 = vadd.f32 %v1177, %v1355
      %v1364 = vadd.f32 %v1178, %v1356
      %v1365 = vadd.f32 %v1179, %v1357
      %v1366 = vadd.f32 %v1180, %v1358
      %v1367 = vadd.f32 %v1181, %v1359
      %v1368 = vadd.f32 %v1182, %v1360
      %v1369 = vadd.f32 %v1183, %v1361
      %vm1370 = vcmp.lt.s32.totalorder %v937, 15
      %1371 = vrot.lane.b32.xlu0 %v1264, 16
      %v1372 = vpop.permute.xlu0 %1371
      %v1373 = vsel %vm1273, %v1372, %v1264
      %1374 = vrot.lane.b32.xlu0 %v1265, 16
      %v1375 = vpop.permute.xlu0 %1374
      %v1376 = vsel %vm1273, %v1375, %v1265
      %1377 = vrot.lane.b32.xlu0 %v1266, 16
      %v1378 = vpop.permute.xlu0 %1377
      %v1379 = vsel %vm1273, %v1378, %v1266
      %1380 = vrot.lane.b32.xlu0 %v1267, 16
      %v1381 = vpop.permute.xlu0 %1380
      %v1382 = vsel %vm1273, %v1381, %v1267
      %1383 = vrot.lane.b32.xlu0 %v1268, 16
      %v1384 = vpop.permute.xlu0 %1383
      %v1385 = vsel %vm1273, %v1384, %v1268
      %1386 = vrot.lane.b32.xlu0 %v1269, 16
      %v1387 = vpop.permute.xlu0 %1386
      %v1388 = vsel %vm1273, %v1387, %v1269
      %1389 = vrot.lane.b32.xlu0 %v1270, 16
      %v1390 = vpop.permute.xlu0 %1389
      %v1391 = vsel %vm1273, %v1390, %v1270
      %1392 = vrot.lane.b32.xlu0 %v1271, 16
      %v1393 = vpop.permute.xlu0 %1392
      %v1394 = vsel %vm1273, %v1393, %v1271
      %1395 = vrot.lane.b32.xlu0 %v1373, 16
      %v1396 = vpop.permute.xlu0 %1395
      %1397 = vrot.lane.b32.xlu0 %v1376, 16
      %v1398 = vpop.permute.xlu0 %1397
      %1399 = vrot.lane.b32.xlu0 %v1379, 16
      %v1400 = vpop.permute.xlu0 %1399
      %1401 = vrot.lane.b32.xlu0 %v1382, 16
      %v1402 = vpop.permute.xlu0 %1401
      %1403 = vrot.lane.b32.xlu0 %v1385, 16
      %v1404 = vpop.permute.xlu0 %1403
      %1405 = vrot.lane.b32.xlu0 %v1388, 16
      %v1406 = vpop.permute.xlu0 %1405
      %1407 = vrot.lane.b32.xlu0 %v1391, 16
      %v1408 = vpop.permute.xlu0 %1407
      %1409 = vrot.lane.b32.xlu0 %v1394, 16
      %v1410 = vpop.permute.xlu0 %1409
      %v1411 = vsel %vm1273, %v1396, %v1264
      %v1412 = vsel %vm1273, %v1398, %v1265
      %v1413 = vsel %vm1273, %v1400, %v1266
      %v1414 = vsel %vm1273, %v1402, %v1267
      %v1415 = vsel %vm1273, %v1404, %v1268
      %v1416 = vsel %vm1273, %v1406, %v1269
      %v1417 = vsel %vm1273, %v1408, %v1270
      %v1418 = vsel %vm1273, %v1410, %v1271
      %1427 = vrot.lane.b32.xlu0 %v1411, 127
      %v1428 = vpop.permute.xlu0 %1427
      %1429 = vrot.lane.b32.xlu0 %v1412, 127
      %v1430 = vpop.permute.xlu0 %1429
      %1431 = vrot.lane.b32.xlu0 %v1413, 127
      %v1432 = vpop.permute.xlu0 %1431
      %1433 = vrot.lane.b32.xlu0 %v1414, 127
      %v1434 = vpop.permute.xlu0 %1433
      %1435 = vrot.lane.b32.xlu0 %v1415, 127
      %v1436 = vpop.permute.xlu0 %1435
      %1437 = vrot.lane.b32.xlu0 %v1416, 127
      %v1438 = vpop.permute.xlu0 %1437
      %1439 = vrot.lane.b32.xlu0 %v1417, 127
      %v1440 = vpop.permute.xlu0 %1439
      %1441 = vrot.lane.b32.xlu0 %v1418, 127
      %v1442 = vpop.permute.xlu0 %1441
      %v1451 = vsel %vm1370, %v1428, 0.0
      %v1452 = vsel %vm1370, %v1430, 0.0
      %v1453 = vsel %vm1370, %v1432, 0.0
      %v1454 = vsel %vm1370, %v1434, 0.0
      %v1455 = vsel %vm1370, %v1436, 0.0
      %v1456 = vsel %vm1370, %v1438, 0.0
      %v1457 = vsel %vm1370, %v1440, 0.0
      %v1458 = vsel %vm1370, %v1442, 0.0
      %v1459 = vadd.f32 %v1362, %v1451
      %v1460 = vadd.f32 %v1363, %v1452
      %v1461 = vadd.f32 %v1364, %v1453
      %v1462 = vadd.f32 %v1365, %v1454
      %v1463 = vadd.f32 %v1366, %v1455
      %v1464 = vadd.f32 %v1367, %v1456
      %v1465 = vadd.f32 %v1368, %v1457
      %v1466 = vadd.f32 %v1369, %v1458
      %v1467 = vld [vmem:[%s341] sm:$0xf]
      %v1470 = vunpack.c.l.s4 1966171168
      %v1471 = vunpack.c.0.s8 %v1470
      %v1472 = vlaneseq
      %v1473 = vshrl.u32 %v1472, 7
      %v1474 = vsub.s32 %v1471, %v1473
      %v1475 = vrot.slane %v1467, %v1474
      %v1476 = vcombine.high %v1475, %v1475
      %v1478 = vunpack.c.l.s4 1966171168
      %v1479 = vunpack.c.0.s8 %v1478
      %v1480 = vlaneseq
      %v1481 = vshrl.u32 %v1480, 7
      %v1482 = vsub.s32 %v1479, %v1481
      %v1483 = vrot.slane %v1475, %v1482
      %v1485 = vunpack.c.l.s4 1966171168
      %v1486 = vunpack.c.0.s8 %v1485
      %v1487 = vlaneseq
      %v1488 = vshrl.u32 %v1487, 7
      %v1489 = vsub.s32 %v1486, %v1488
      %v1490 = vrot.slane %v1476, %v1489
      %v1491 = vcombine.high %v1483, %v1483
      %v1492 = vcombine.high %v1490, %v1490
      %v1493 = vlaneseq
      %v1494 = vshrl.u32 %v1493, 7
      %v1495 = vsub.s32 0, %v1494
      %v1496 = vrot.slane %v1483, %v1495
      %v1497 = vlaneseq
      %v1498 = vshrl.u32 %v1497, 7
      %v1499 = vsub.s32 0, %v1498
      %v1500 = vrot.slane %v1490, %v1499
      %v1501 = vlaneseq
      %v1502 = vshrl.u32 %v1501, 7
      %v1503 = vsub.s32 0, %v1502
      %v1504 = vrot.slane %v1491, %v1503
      %v1505 = vlaneseq
      %v1506 = vshrl.u32 %v1505, 7
      %v1507 = vsub.s32 0, %v1506
      %v1508 = vrot.slane %v1492, %v1507
      %1509 = vset.pattern.permute.xlu0 0
      %1510 = vperm.xlu0 %1509, %v1496
      %v1511 = vpop.permute.xlu0 %1510
      %1513 = vset.pattern.permute.xlu0 0
      %1514 = vperm.xlu0 %1513, %v1500
      %v1515 = vpop.permute.xlu0 %1514
      %1517 = vset.pattern.permute.xlu0 0
      %1518 = vperm.xlu0 %1517, %v1504
      %v1519 = vpop.permute.xlu0 %1518
      %1521 = vset.pattern.permute.xlu0 0
      %1522 = vperm.xlu0 %1521, %v1508
      %v1523 = vpop.permute.xlu0 %1522
      %v1525 = vadd.f32 %v1459, %v1511
      %v1526 = vadd.f32 %v1460, %v1511
      %v1527 = vadd.f32 %v1461, %v1515
      %v1528 = vadd.f32 %v1462, %v1515
      %v1529 = vadd.f32 %v1463, %v1519
      %v1530 = vadd.f32 %v1464, %v1519
      %v1531 = vadd.f32 %v1465, %v1523
      %v1532 = vadd.f32 %v1466, %v1523
      %v1533 = vadd.f32 %v899, %v1525
      %v1534 = vadd.f32 %v900, %v1526
      %v1535 = vadd.f32 %v901, %v1527
      %v1536 = vadd.f32 %v902, %v1528
      %v1537 = vadd.f32 %v903, %v1529
      %v1538 = vadd.f32 %v904, %v1530
      %v1539 = vadd.f32 %v905, %v1531
      %v1540 = vadd.f32 %v906, %v1532
      %1541 = vst.msk [vmem:[%s350] sm:$0xff] %vm369, %v1533
      %1542 = vst.msk [vmem:[%s350 + $0x8] sm:$0xff] %vm369, %v1534
      %1543 = vst.msk [vmem:[%s350 + $0x10] sm:$0xff] %vm369, %v1535
      %1544 = vst.msk [vmem:[%s350 + $0x18] sm:$0xff] %vm369, %v1536
      %1545 = vst.msk [vmem:[%s350 + $0x20] sm:$0xff] %vm369, %v1537
      %1546 = vst.msk [vmem:[%s350 + $0x28] sm:$0xff] %vm369, %v1538
      %1547 = vst.msk [vmem:[%s350 + $0x30] sm:$0xff] %vm369, %v1539
      %1548 = vst.msk [vmem:[%s350 + $0x38] sm:$0xff] %vm369, %v1540
      %s1549 = smul.u32 8, %s23
      %p1550 = scmp.lt.s32.totalorder %s22, 1
      %s1551 = scalar_select %p1550, %s22, 1
      %p1552 = scmp.lt.s32.totalorder %s1549, 7
      %s1553 = scalar_select %p1552, %s1549, 7
      %s1554 = smul.addr %s1551, 8
      %s1555 = sadd.s32 %s1553, %s1554
      %s1556 = smul.addr %s1555, 8
      %s1557 = scalar_lea.vmem %s7, %s1556
      // Predicated region
      $region49: #{tpu_custom_call.1} parent=47 // pred_check
        %p1558 = pneg %p214
      $region50: #{tpu_custom_call.1} parent=47 // pred_check_branch
        %1560 = sbr.rel (%p1558) target = $region52
      $region51: #{tpu_custom_call.1} parent=47 // pred_region
        %s1561 = smul.u32 8, %s23
      $region52: #{tpu_custom_call.1} parent=47 // pred_fallthru
        _
    $region48: #{tpu_custom_call.1} parent=5 // pred_fallthru
      _
    %p1562 = scmp.le.s32.totalorder 2, %s13
    // Predicated region
    $region53: #{tpu_custom_call.1} parent=5 // pred_check
      %p1563 = pneg %p1562
    $region54: #{tpu_custom_call.1} parent=5 // pred_check_branch
      %1565 = sbr.rel (%p1563) target = $region56
    $region55: #{tpu_custom_call.1} parent=5 // pred_region
      %s1566 = ssub.s32 %s13, 2
      // Predicated region
      $region57: #{tpu_custom_call.1} parent=55 // pred_check
        %p1567 = pneg %p220
      $region58: #{tpu_custom_call.1} parent=55 // pred_check_branch
        %1569 = sbr.rel (%p1567) target = $region60
      $region59: #{tpu_custom_call.1} parent=55 // pred_region
        %s1570 = smul.u32 8, %s25
        %p1571 = scmp.lt.s32.totalorder %s24, 1
        %s1572 = scalar_select %p1571, %s24, 1
        %p1573 = scmp.lt.s32.totalorder %s1570, 7
        %s1574 = scalar_select %p1573, %s1570, 7
        %s1575 = smul.addr %s1572, 8
        %s1576 = sadd.s32 %s1574, %s1575
        %s1577 = smul.addr %s1576, 8
        %s1578 = scalar_lea.vmem %s7, %s1577
      $region60: #{tpu_custom_call.1} parent=55 // pred_fallthru
        _
    $region56: #{tpu_custom_call.1} parent=5 // pred_fallthru
      _
  $region6: #{tpu_custom_call.1} parent=0 // loop_footer
    %s17 = sadd.s32 1, %s13
  $region7: #{tpu_custom_call.1} parent=0 // loop_footer_branch
    %12 = sbr.rel target = $region3
  $region8: #{tpu_custom_call.1} parent=0 // loop_exit
    _

</llo_original>
